<compile_context>
chip_gen: v5e
topology: v5e:2x2
jax: 0.10.0
libtpu: 0.0.40
codegen_flags: <defaults>
</compile_context>

<pallas_src>
import math
import jax
import jax.numpy as jnp
from jax.experimental import pallas as pl

# ---------------- config (small, consistent with the module's forward) ----------------
BATCH = 2
SEQ = 8
HIDDEN = 32
NUM_HEADS = 2
HEAD_DIM = HIDDEN // NUM_HEADS
INTERMEDIATE = 64
NUM_LAYERS = 2
VOCAB = 100
MAX_POS = 16
NUM_LABELS = 2
LN_EPS = 1e-12
ATTN_SCALE = 1.0 / math.sqrt(HEAD_DIM)
LANE = 128  # lane-dense output width

# ---- packed per-layer weight-matrix layout: one (NUM_LAYERS, 64, 224) bf16 array ----
#   cols [  0: 96) rows[:32] : fused QKV projection   (H, 3H)
#   cols [ 96:128) rows[:32] : attention output proj  (H, H)
#   cols [128:192) rows[:32] : FFN input proj         (H, I)
#   cols [192:224) rows[:64] : FFN output proj        (I, H)
_QKV0, _QKV1 = 0, 3 * HIDDEN
_WO0, _WO1 = _QKV1, _QKV1 + HIDDEN
_WI0, _WI1 = _WO1, _WO1 + INTERMEDIATE
_WF0, _WF1 = _WI1, _WI1 + HIDDEN
_WCOLS = _WF1                                  # 224
_WROWS = max(HIDDEN, INTERMEDIATE)             # 64

# ---- packed per-layer vector layout: one (NUM_LAYERS, 8, 96) f32 array ----
# rows: 0 b_qkv | 1 b_attn_out | 2 b_ffn_in | 3 b_ffn_out | 4 ln1_g | 5 ln1_b | 6 ln2_g | 7 ln2_b


# ---------------- in-kernel helpers ----------------
def _layernorm(x, g, b):
    mu = jnp.mean(x, axis=-1, keepdims=True)
    var = jnp.mean((x - mu) ** 2, axis=-1, keepdims=True)
    return (x - mu) * jax.lax.rsqrt(var + LN_EPS) * g + b


def _mm(a_f32, w_bf16):
    # bf16 MXU operands (weights already bf16), f32 accumulation.
    return jnp.dot(a_f32.astype(jnp.bfloat16), w_bf16,
                   preferred_element_type=jnp.float32)


# ---------------- the fused forward-pass kernel (single step, whole batch) ----------------
def bert_forward_kernel(emb_ref, bias_ref, wl_ref, vl_ref, hw_ref, hv_ref, o_ref):
    # Embedding LayerNorm over all B*S rows at once (embedding dropout = identity in eval).
    emb_g = hv_ref[0:1, :HIDDEN]
    emb_b = hv_ref[1:2, :HIDDEN]
    x = _layernorm(emb_ref[...], emb_g, emb_b)                 # (B*S, H) f32
    bias = bias_ref[...]                                       # (B, S) additive key bias

    # Encoder layers; short static loop is unrolled.
    for l in range(NUM_LAYERS):
        W = wl_ref[l]                                          # (64, 224) bf16
        V = vl_ref[l]                                          # (8, 96)  f32
        wqkv = W[:HIDDEN, _QKV0:_QKV1]                         # (H, 3H)
        wo = W[:HIDDEN, _WO0:_WO1]                             # (H, H)
        wi = W[:HIDDEN, _WI0:_WI1]                             # (H, I)
        wf = W[:INTERMEDIATE, _WF0:_WF1]                       # (I, H)
        b_qkv = V[0:1, :3 * HIDDEN]
        b_ao = V[1:2, :HIDDEN]
        b_fi = V[2:3, :INTERMEDIATE]
        b_fo = V[3:4, :HIDDEN]
        g1, b1 = V[4:5, :HIDDEN], V[5:6, :HIDDEN]
        g2, b2 = V[6:7, :HIDDEN], V[7:8, :HIDDEN]

        # Fused QKV for the whole folded batch: one (B*S,H)x(H,3H) matmul.
        qkv = _mm(x, wqkv) + b_qkv                             # (B*S, 3H) f32

        # Self-attention, per (example, head): 2-D matmuls on static slices, no transposes.
        ex_attn = []
        for b in range(BATCH):
            r0, r1 = b * SEQ, (b + 1) * SEQ
            kbias = bias[b:b + 1, :]                           # (1, S)
            attn_b = jnp.zeros((SEQ, HIDDEN), jnp.float32)
            for h in range(NUM_HEADS):
                c = h * HEAD_DIM
                q = qkv[r0:r1, c:c + HEAD_DIM].astype(jnp.bfloat16)                    # (S, HD)
                k = qkv[r0:r1, HIDDEN + c:HIDDEN + c + HEAD_DIM].astype(jnp.bfloat16)
                v = qkv[r0:r1, 2 * HIDDEN + c:2 * HIDDEN + c + HEAD_DIM].astype(jnp.bfloat16)
                # q @ k^T without a physical transpose: contract last dims of both operands.
                s = jax.lax.dot_general(q, k, (((1,), (1,)), ((), ())),
                                        preferred_element_type=jnp.float32)            # (S, S)
                s = s * ATTN_SCALE + kbias
                m = jnp.max(s, axis=-1, keepdims=True)
                e = jnp.exp(s - m)
                # EUP reciprocal (approx) instead of a VALU divide.
                p = e * pl.reciprocal(jnp.sum(e, axis=-1, keepdims=True), approx=True)
                ctx = jnp.dot(p.astype(jnp.bfloat16), v,
                              preferred_element_type=jnp.float32)                      # (S, HD)
                # Fold head context straight into the output projection:
                #   ctx_full @ wo == sum_h ctx_h @ wo[h*HD:(h+1)*HD, :]   (no lane concat)
                attn_b = attn_b + _mm(ctx, wo[c:c + HEAD_DIM, :])
            ex_attn.append(attn_b)
        attn = jnp.concatenate(ex_attn, axis=0) + b_ao         # (B*S, H)

        y = _layernorm(x + attn, g1, b1)
        # TODO(synk): HF BERT uses exact erf-GELU; tanh-approx GELU used for Mosaic-safe lowering.
        ff = jax.nn.gelu(_mm(y, wi) + b_fi, approximate=True)
        ff2 = _mm(ff, wf) + b_fo
        x = _layernorm(y + ff2, g2, b2)

    # BERT pooler: tanh(Linear(H,H)) on each example's [CLS] token, eval-mode identity dropout,
    # then the classification head (zero-padded to 128 lanes for an unmasked, lane-dense store).
    cls = jnp.concatenate([x[b * SEQ:b * SEQ + 1, :] for b in range(BATCH)], axis=0)  # (B, H)
    pool_w = hw_ref[:, :HIDDEN]                                # (H, H)   bf16
    cls_w = hw_ref[:, HIDDEN:HIDDEN + LANE]                    # (H, 128) bf16, zero-padded
    pool_b = hv_ref[2:3, :HIDDEN]                              # (1, H)
    cls_b = hv_ref[3:4, :]                                     # (1, 128)
    pooled = jnp.tanh(_mm(cls, pool_w) + pool_b)
    o_ref[...] = _mm(pooled, cls_w) + cls_b                    # (B, 128) f32, lane-dense


# ---------------- parameter init (deterministic, synthetic, pre-packed & pre-cast) ----------------
def init_params(key):
    def nrm(k, shape, scale=0.02):
        return scale * jax.random.normal(k, shape, dtype=jnp.float32)

    keys = iter(jax.random.split(key, 16))
    L, H, I = NUM_LAYERS, HIDDEN, INTERMEDIATE

    wqkv = nrm(next(keys), (L, H, 3 * H))
    wo = nrm(next(keys), (L, H, H))
    wi = nrm(next(keys), (L, H, I))
    wo2 = nrm(next(keys), (L, I, H))
    pooler_w = nrm(next(keys), (H, H))
    cls_w = nrm(next(keys), (H, NUM_LABELS))

    # Packed per-layer matrices (bf16 once, halves weight DMA bytes).
    w_layers = jnp.zeros((L, _WROWS, _WCOLS), jnp.float32)
    w_layers = w_layers.at[:, :H, _QKV0:_QKV1].set(wqkv)
    w_layers = w_layers.at[:, :H, _WO0:_WO1].set(wo)
    w_layers = w_layers.at[:, :H, _WI0:_WI1].set(wi)
    w_layers = w_layers.at[:, :I, _WF0:_WF1].set(wo2)
    w_layers = w_layers.astype(jnp.bfloat16)

    # Packed per-layer vectors (biases zero, LayerNorm gammas one) — stays f32.
    v_layers = jnp.zeros((L, 8, 3 * H), jnp.float32)
    v_layers = v_layers.at[:, 4, :H].set(1.0)   # ln1 gamma
    v_layers = v_layers.at[:, 6, :H].set(1.0)   # ln2 gamma

    # Pooler + classifier matrices, classifier zero-padded to 128 output lanes.
    head_w = jnp.zeros((H, H + LANE), jnp.float32)
    head_w = head_w.at[:, :H].set(pooler_w)
    head_w = head_w.at[:, H:H + NUM_LABELS].set(cls_w)
    head_w = head_w.astype(jnp.bfloat16)

    # Misc vectors: emb_ln_g | emb_ln_b | pooler_b | cls_b (padded) — stays f32.
    head_v = jnp.zeros((4, LANE), jnp.float32)
    head_v = head_v.at[0, :H].set(1.0)          # embedding LN gamma

    return {
        "word_emb": nrm(next(keys), (VOCAB, H)),
        "pos_emb": nrm(next(keys), (MAX_POS, H)),
        "type_emb": nrm(next(keys), (2, H)),
        "w_layers": w_layers,
        "v_layers": v_layers,
        "head_w": head_w,
        "head_v": head_v,
    }


# ---------------- forward (mirrors BertClassifier.forward) ----------------
def bert_classifier_forward(params, input_ids, attention_mask):
    B, S = input_ids.shape

    # Embedding gathers are glue in plain JAX; everything downstream is one fused kernel.
    word = jnp.take(params["word_emb"], input_ids, axis=0)            # (B, S, H)
    pos = params["pos_emb"][:S][None, :, :]                           # (1, S, H)
    typ = params["type_emb"][0][None, None, :]                        # all token_type_ids = 0
    emb = (word + pos + typ).reshape(B * S, HIDDEN)                   # batch folded into sublanes

    # Additive attention bias, identical for every layer (precomputed once).
    bias = (1.0 - attention_mask.astype(jnp.float32)) * -10000.0      # (B, S)

    logits_padded = pl.pallas_call(
        bert_forward_kernel,
        # Single grid-less step; default whole-array VMEM blocks. Total working set (<1 MiB)
        # fits VMEM on every TPU generation (incl. v7x's 64 MiB), so no tiling is needed.
        out_shape=jax.ShapeDtypeStruct((B, LANE), jnp.float32),
    )(emb, bias, params["w_layers"], params["v_layers"],
      params["head_w"], params["head_v"])
    return logits_padded[:, :NUM_LABELS]                              # (B, 2)


if __name__ == "__main__":
    key = jax.random.PRNGKey(0)
    k_param, k_ids = jax.random.split(key)

    params = init_params(k_param)

    input_ids = jax.random.randint(k_ids, (BATCH, SEQ), 0, VOCAB, dtype=jnp.int32)
    # attention mask: second example has its last 3 tokens padded out.
    attention_mask = jnp.array(
        [[1, 1, 1, 1, 1, 1, 1, 1],
         [1, 1, 1, 1, 1, 0, 0, 0]], dtype=jnp.int32)

    logits = bert_classifier_forward(params, input_ids, attention_mask)
    jax.block_until_ready(logits)
    assert logits.shape == (BATCH, NUM_LABELS) and logits.dtype == jnp.float32
    print("KERNEL_OK")
</pallas_src>

<mosaic_0001>
module attributes {stable_mosaic.version = 11 : i64} {
  func.func @bert_forward_kernel(%arg0: memref<16x32xf32, #tpu.memory_space<vmem>>, %arg1: memref<2x8xf32, #tpu.memory_space<vmem>>, %arg2: memref<2x64x224xbf16, #tpu.memory_space<vmem>>, %arg3: memref<2x8x96xf32, #tpu.memory_space<vmem>>, %arg4: memref<32x160xbf16, #tpu.memory_space<vmem>>, %arg5: memref<4x128xf32, #tpu.memory_space<vmem>>, %arg6: memref<2x128xf32, #tpu.memory_space<vmem>>) attributes {dimension_semantics = [], scalar_prefetch = 0 : i64, scratch_operands = 0 : i64, tpu.core_type = #tpu.core_type<tc>} {
    %c0 = arith.constant 0 : index
    %c0_0 = arith.constant 0 : index
    %0 = vector.load %arg5[%c0, %c0_0] : memref<4x128xf32, #tpu.memory_space<vmem>>, vector<1x32xf32>
    %c1 = arith.constant 1 : index
    %c0_1 = arith.constant 0 : index
    %1 = vector.load %arg5[%c1, %c0_1] : memref<4x128xf32, #tpu.memory_space<vmem>>, vector<1x32xf32>
    %c0_2 = arith.constant 0 : index
    %c0_3 = arith.constant 0 : index
    %2 = vector.load %arg0[%c0_2, %c0_3] : memref<16x32xf32, #tpu.memory_space<vmem>>, vector<16x32xf32>
    %cst = arith.constant dense<0.000000e+00> : vector<16xf32>
    %3 = vector.multi_reduction <add>, %2, %cst [1] : vector<16x32xf32> to vector<16xf32>
    %4 = vector.shape_cast %3 : vector<16xf32> to vector<16x1xf32>
    %cst_4 = arith.constant 3.200000e+01 : f32
    %5 = vector.broadcast %cst_4 : f32 to vector<16x1xf32>
    %6 = arith.divf %4, %5 : vector<16x1xf32>
    %7 = vector.broadcast %6 : vector<16x1xf32> to vector<16x32xf32>
    %8 = arith.subf %2, %7 : vector<16x32xf32>
    %9 = arith.mulf %8, %8 : vector<16x32xf32>
    %cst_5 = arith.constant dense<0.000000e+00> : vector<16xf32>
    %10 = vector.multi_reduction <add>, %9, %cst_5 [1] : vector<16x32xf32> to vector<16xf32>
    %11 = vector.shape_cast %10 : vector<16xf32> to vector<16x1xf32>
    %cst_6 = arith.constant 3.200000e+01 : f32
    %12 = vector.broadcast %cst_6 : f32 to vector<16x1xf32>
    %13 = arith.divf %11, %12 : vector<16x1xf32>
    %14 = vector.broadcast %6 : vector<16x1xf32> to vector<16x32xf32>
    %15 = arith.subf %2, %14 : vector<16x32xf32>
    %cst_7 = arith.constant 9.99999996E-13 : f32
    %16 = vector.broadcast %cst_7 : f32 to vector<16x1xf32>
    %17 = arith.addf %13, %16 : vector<16x1xf32>
    %18 = math.rsqrt %17 : vector<16x1xf32>
    %19 = vector.broadcast %18 : vector<16x1xf32> to vector<16x32xf32>
    %20 = arith.mulf %15, %19 : vector<16x32xf32>
    %21 = vector.broadcast %0 : vector<1x32xf32> to vector<16x32xf32>
    %22 = arith.mulf %20, %21 : vector<16x32xf32>
    %23 = vector.broadcast %1 : vector<1x32xf32> to vector<16x32xf32>
    %24 = arith.addf %22, %23 : vector<16x32xf32>
    %c0_8 = arith.constant 0 : index
    %c0_9 = arith.constant 0 : index
    %25 = vector.load %arg1[%c0_8, %c0_9] : memref<2x8xf32, #tpu.memory_space<vmem>>, vector<2x8xf32>
    %c0_10 = arith.constant 0 : index
    %c0_11 = arith.constant 0 : index
    %c0_12 = arith.constant 0 : index
    %26 = vector.load %arg2[%c0_10, %c0_11, %c0_12] : memref<2x64x224xbf16, #tpu.memory_space<vmem>>, vector<1x64x224xbf16>
    %27 = vector.shape_cast %26 : vector<1x64x224xbf16> to vector<64x224xbf16>
    %c0_13 = arith.constant 0 : index
    %c0_14 = arith.constant 0 : index
    %c0_15 = arith.constant 0 : index
    %28 = vector.load %arg3[%c0_13, %c0_14, %c0_15] : memref<2x8x96xf32, #tpu.memory_space<vmem>>, vector<1x8x96xf32>
    %29 = vector.shape_cast %28 : vector<1x8x96xf32> to vector<8x96xf32>
    %30 = vector.extract_strided_slice %27 {offsets = [0, 0], sizes = [32, 96], strides = [1, 1]} : vector<64x224xbf16> to vector<32x96xbf16>
    %31 = vector.extract_strided_slice %27 {offsets = [0, 96], sizes = [32, 32], strides = [1, 1]} : vector<64x224xbf16> to vector<32x32xbf16>
    %32 = vector.extract_strided_slice %27 {offsets = [0, 128], sizes = [32, 64], strides = [1, 1]} : vector<64x224xbf16> to vector<32x64xbf16>
    %33 = vector.extract_strided_slice %27 {offsets = [0, 192], sizes = [64, 32], strides = [1, 1]} : vector<64x224xbf16> to vector<64x32xbf16>
    %34 = vector.extract_strided_slice %29 {offsets = [0, 0], sizes = [1, 96], strides = [1, 1]} : vector<8x96xf32> to vector<1x96xf32>
    %35 = vector.extract_strided_slice %29 {offsets = [1, 0], sizes = [1, 32], strides = [1, 1]} : vector<8x96xf32> to vector<1x32xf32>
    %36 = vector.extract_strided_slice %29 {offsets = [2, 0], sizes = [1, 64], strides = [1, 1]} : vector<8x96xf32> to vector<1x64xf32>
    %37 = vector.extract_strided_slice %29 {offsets = [3, 0], sizes = [1, 32], strides = [1, 1]} : vector<8x96xf32> to vector<1x32xf32>
    %38 = vector.extract_strided_slice %29 {offsets = [4, 0], sizes = [1, 32], strides = [1, 1]} : vector<8x96xf32> to vector<1x32xf32>
    %39 = vector.extract_strided_slice %29 {offsets = [5, 0], sizes = [1, 32], strides = [1, 1]} : vector<8x96xf32> to vector<1x32xf32>
    %40 = vector.extract_strided_slice %29 {offsets = [6, 0], sizes = [1, 32], strides = [1, 1]} : vector<8x96xf32> to vector<1x32xf32>
    %41 = vector.extract_strided_slice %29 {offsets = [7, 0], sizes = [1, 32], strides = [1, 1]} : vector<8x96xf32> to vector<1x32xf32>
    %42 = arith.truncf %24 : vector<16x32xf32> to vector<16x32xbf16>
    %cst_16 = arith.constant dense<0.000000e+00> : vector<16x96xf32>
    %43 = tpu.matmul %42, %30, %cst_16 {dimension_numbers = #tpu.dot_dimension_numbers<[1], [0], [0], [1], [0, 0, 1, 1], [], []>} : vector<16x32xbf16>, vector<32x96xbf16>, vector<16x96xf32> -> vector<16x96xf32>
    %44 = vector.broadcast %34 : vector<1x96xf32> to vector<16x96xf32>
    %45 = arith.addf %43, %44 : vector<16x96xf32>
    %46 = vector.extract_strided_slice %25 {offsets = [0, 0], sizes = [1, 8], strides = [1, 1]} : vector<2x8xf32> to vector<1x8xf32>
    %cst_17 = arith.constant 0.000000e+00 : f32
    %47 = vector.broadcast %cst_17 : f32 to vector<8x32xf32>
    %48 = vector.extract_strided_slice %45 {offsets = [0, 0], sizes = [8, 16], strides = [1, 1]} : vector<16x96xf32> to vector<8x16xf32>
    %49 = arith.truncf %48 : vector<8x16xf32> to vector<8x16xbf16>
    %50 = vector.extract_strided_slice %45 {offsets = [0, 32], sizes = [8, 16], strides = [1, 1]} : vector<16x96xf32> to vector<8x16xf32>
    %51 = arith.truncf %50 : vector<8x16xf32> to vector<8x16xbf16>
    %52 = vector.extract_strided_slice %45 {offsets = [0, 64], sizes = [8, 16], strides = [1, 1]} : vector<16x96xf32> to vector<8x16xf32>
    %53 = arith.truncf %52 : vector<8x16xf32> to vector<8x16xbf16>
    %cst_18 = arith.constant dense<0.000000e+00> : vector<8x8xf32>
    %54 = tpu.matmul %49, %51, %cst_18 {dimension_numbers = #tpu.dot_dimension_numbers<[1], [1], [0], [0], [0, 0, 1, 0], [], []>} : vector<8x16xbf16>, vector<8x16xbf16>, vector<8x8xf32> -> vector<8x8xf32>
    %cst_19 = arith.constant 2.500000e-01 : f32
    %55 = vector.broadcast %cst_19 : f32 to vector<8x8xf32>
    %56 = arith.mulf %54, %55 : vector<8x8xf32>
    %57 = vector.broadcast %46 : vector<1x8xf32> to vector<8x8xf32>
    %58 = arith.addf %56, %57 : vector<8x8xf32>
    %cst_20 = arith.constant dense<0xFF800000> : vector<8xf32>
    %59 = vector.multi_reduction <maximumf>, %58, %cst_20 [1] : vector<8x8xf32> to vector<8xf32>
    %60 = vector.shape_cast %59 : vector<8xf32> to vector<8x1xf32>
    %61 = vector.broadcast %60 : vector<8x1xf32> to vector<8x8xf32>
    %62 = arith.subf %58, %61 : vector<8x8xf32>
    %63 = math.exp %62 : vector<8x8xf32>
    %cst_21 = arith.constant dense<0.000000e+00> : vector<8xf32>
    %64 = vector.multi_reduction <add>, %63, %cst_21 [1] : vector<8x8xf32> to vector<8xf32>
    %65 = vector.shape_cast %64 : vector<8xf32> to vector<8x1xf32>
    %66 = tpu.reciprocal %65 {approx = true} : vector<8x1xf32> -> vector<8x1xf32>
    %67 = vector.broadcast %66 : vector<8x1xf32> to vector<8x8xf32>
    %68 = arith.mulf %63, %67 : vector<8x8xf32>
    %69 = arith.truncf %68 : vector<8x8xf32> to vector<8x8xbf16>
    %cst_22 = arith.constant dense<0.000000e+00> : vector<8x16xf32>
    %70 = tpu.matmul %69, %53, %cst_22 {dimension_numbers = #tpu.dot_dimension_numbers<[1], [0], [0], [1], [0, 0, 1, 1], [], []>} : vector<8x8xbf16>, vector<8x16xbf16>, vector<8x16xf32> -> vector<8x16xf32>
    %71 = vector.extract_strided_slice %31 {offsets = [0, 0], sizes = [16, 32], strides = [1, 1]} : vector<32x32xbf16> to vector<16x32xbf16>
    %72 = arith.truncf %70 : vector<8x16xf32> to vector<8x16xbf16>
    %cst_23 = arith.constant dense<0.000000e+00> : vector<8x32xf32>
    %73 = tpu.matmul %72, %71, %cst_23 {dimension_numbers = #tpu.dot_dimension_numbers<[1], [0], [0], [1], [0, 0, 1, 1], [], []>} : vector<8x16xbf16>, vector<16x32xbf16>, vector<8x32xf32> -> vector<8x32xf32>
    %74 = arith.addf %47, %73 : vector<8x32xf32>
    %75 = vector.extract_strided_slice %45 {offsets = [0, 16], sizes = [8, 16], strides = [1, 1]} : vector<16x96xf32> to vector<8x16xf32>
    %76 = arith.truncf %75 : vector<8x16xf32> to vector<8x16xbf16>
    %77 = vector.extract_strided_slice %45 {offsets = [0, 48], sizes = [8, 16], strides = [1, 1]} : vector<16x96xf32> to vector<8x16xf32>
    %78 = arith.truncf %77 : vector<8x16xf32> to vector<8x16xbf16>
    %79 = vector.extract_strided_slice %45 {offsets = [0, 80], sizes = [8, 16], strides = [1, 1]} : vector<16x96xf32> to vector<8x16xf32>
    %80 = arith.truncf %79 : vector<8x16xf32> to vector<8x16xbf16>
    %cst_24 = arith.constant dense<0.000000e+00> : vector<8x8xf32>
    %81 = tpu.matmul %76, %78, %cst_24 {dimension_numbers = #tpu.dot_dimension_numbers<[1], [1], [0], [0], [0, 0, 1, 0], [], []>} : vector<8x16xbf16>, vector<8x16xbf16>, vector<8x8xf32> -> vector<8x8xf32>
    %cst_25 = arith.constant 2.500000e-01 : f32
    %82 = vector.broadcast %cst_25 : f32 to vector<8x8xf32>
    %83 = arith.mulf %81, %82 : vector<8x8xf32>
    %84 = vector.broadcast %46 : vector<1x8xf32> to vector<8x8xf32>
    %85 = arith.addf %83, %84 : vector<8x8xf32>
    %cst_26 = arith.constant dense<0xFF800000> : vector<8xf32>
    %86 = vector.multi_reduction <maximumf>, %85, %cst_26 [1] : vector<8x8xf32> to vector<8xf32>
    %87 = vector.shape_cast %86 : vector<8xf32> to vector<8x1xf32>
    %88 = vector.broadcast %87 : vector<8x1xf32> to vector<8x8xf32>
    %89 = arith.subf %85, %88 : vector<8x8xf32>
    %90 = math.exp %89 : vector<8x8xf32>
    %cst_27 = arith.constant dense<0.000000e+00> : vector<8xf32>
    %91 = vector.multi_reduction <add>, %90, %cst_27 [1] : vector<8x8xf32> to vector<8xf32>
    %92 = vector.shape_cast %91 : vector<8xf32> to vector<8x1xf32>
    %93 = tpu.reciprocal %92 {approx = true} : vector<8x1xf32> -> vector<8x1xf32>
    %94 = vector.broadcast %93 : vector<8x1xf32> to vector<8x8xf32>
    %95 = arith.mulf %90, %94 : vector<8x8xf32>
    %96 = arith.truncf %95 : vector<8x8xf32> to vector<8x8xbf16>
    %cst_28 = arith.constant dense<0.000000e+00> : vector<8x16xf32>
    %97 = tpu.matmul %96, %80, %cst_28 {dimension_numbers = #tpu.dot_dimension_numbers<[1], [0], [0], [1], [0, 0, 1, 1], [], []>} : vector<8x8xbf16>, vector<8x16xbf16>, vector<8x16xf32> -> vector<8x16xf32>
    %98 = vector.extract_strided_slice %31 {offsets = [16, 0], sizes = [16, 32], strides = [1, 1]} : vector<32x32xbf16> to vector<16x32xbf16>
    %99 = arith.truncf %97 : vector<8x16xf32> to vector<8x16xbf16>
    %cst_29 = arith.constant dense<0.000000e+00> : vector<8x32xf32>
    %100 = tpu.matmul %99, %98, %cst_29 {dimension_numbers = #tpu.dot_dimension_numbers<[1], [0], [0], [1], [0, 0, 1, 1], [], []>} : vector<8x16xbf16>, vector<16x32xbf16>, vector<8x32xf32> -> vector<8x32xf32>
    %101 = arith.addf %74, %100 : vector<8x32xf32>
    %102 = vector.extract_strided_slice %25 {offsets = [1, 0], sizes = [1, 8], strides = [1, 1]} : vector<2x8xf32> to vector<1x8xf32>
    %cst_30 = arith.constant 0.000000e+00 : f32
    %103 = vector.broadcast %cst_30 : f32 to vector<8x32xf32>
    %104 = vector.extract_strided_slice %45 {offsets = [8, 0], sizes = [8, 16], strides = [1, 1]} : vector<16x96xf32> to vector<8x16xf32>
    %105 = arith.truncf %104 : vector<8x16xf32> to vector<8x16xbf16>
    %106 = vector.extract_strided_slice %45 {offsets = [8, 32], sizes = [8, 16], strides = [1, 1]} : vector<16x96xf32> to vector<8x16xf32>
    %107 = arith.truncf %106 : vector<8x16xf32> to vector<8x16xbf16>
    %108 = vector.extract_strided_slice %45 {offsets = [8, 64], sizes = [8, 16], strides = [1, 1]} : vector<16x96xf32> to vector<8x16xf32>
    %109 = arith.truncf %108 : vector<8x16xf32> to vector<8x16xbf16>
    %cst_31 = arith.constant dense<0.000000e+00> : vector<8x8xf32>
    %110 = tpu.matmul %105, %107, %cst_31 {dimension_numbers = #tpu.dot_dimension_numbers<[1], [1], [0], [0], [0, 0, 1, 0], [], []>} : vector<8x16xbf16>, vector<8x16xbf16>, vector<8x8xf32> -> vector<8x8xf32>
    %cst_32 = arith.constant 2.500000e-01 : f32
    %111 = vector.broadcast %cst_32 : f32 to vector<8x8xf32>
    %112 = arith.mulf %110, %111 : vector<8x8xf32>
    %113 = vector.broadcast %102 : vector<1x8xf32> to vector<8x8xf32>
    %114 = arith.addf %112, %113 : vector<8x8xf32>
    %cst_33 = arith.constant dense<0xFF800000> : vector<8xf32>
    %115 = vector.multi_reduction <maximumf>, %114, %cst_33 [1] : vector<8x8xf32> to vector<8xf32>
    %116 = vector.shape_cast %115 : vector<8xf32> to vector<8x1xf32>
    %117 = vector.broadcast %116 : vector<8x1xf32> to vector<8x8xf32>
    %118 = arith.subf %114, %117 : vector<8x8xf32>
    %119 = math.exp %118 : vector<8x8xf32>
    %cst_34 = arith.constant dense<0.000000e+00> : vector<8xf32>
    %120 = vector.multi_reduction <add>, %119, %cst_34 [1] : vector<8x8xf32> to vector<8xf32>
    %121 = vector.shape_cast %120 : vector<8xf32> to vector<8x1xf32>
    %122 = tpu.reciprocal %121 {approx = true} : vector<8x1xf32> -> vector<8x1xf32>
    %123 = vector.broadcast %122 : vector<8x1xf32> to vector<8x8xf32>
    %124 = arith.mulf %119, %123 : vector<8x8xf32>
    %125 = arith.truncf %124 : vector<8x8xf32> to vector<8x8xbf16>
    %cst_35 = arith.constant dense<0.000000e+00> : vector<8x16xf32>
    %126 = tpu.matmul %125, %109, %cst_35 {dimension_numbers = #tpu.dot_dimension_numbers<[1], [0], [0], [1], [0, 0, 1, 1], [], []>} : vector<8x8xbf16>, vector<8x16xbf16>, vector<8x16xf32> -> vector<8x16xf32>
    %127 = vector.extract_strided_slice %31 {offsets = [0, 0], sizes = [16, 32], strides = [1, 1]} : vector<32x32xbf16> to vector<16x32xbf16>
    %128 = arith.truncf %126 : vector<8x16xf32> to vector<8x16xbf16>
    %cst_36 = arith.constant dense<0.000000e+00> : vector<8x32xf32>
    %129 = tpu.matmul %128, %127, %cst_36 {dimension_numbers = #tpu.dot_dimension_numbers<[1], [0], [0], [1], [0, 0, 1, 1], [], []>} : vector<8x16xbf16>, vector<16x32xbf16>, vector<8x32xf32> -> vector<8x32xf32>
    %130 = arith.addf %103, %129 : vector<8x32xf32>
    %131 = vector.extract_strided_slice %45 {offsets = [8, 16], sizes = [8, 16], strides = [1, 1]} : vector<16x96xf32> to vector<8x16xf32>
    %132 = arith.truncf %131 : vector<8x16xf32> to vector<8x16xbf16>
    %133 = vector.extract_strided_slice %45 {offsets = [8, 48], sizes = [8, 16], strides = [1, 1]} : vector<16x96xf32> to vector<8x16xf32>
    %134 = arith.truncf %133 : vector<8x16xf32> to vector<8x16xbf16>
    %135 = vector.extract_strided_slice %45 {offsets = [8, 80], sizes = [8, 16], strides = [1, 1]} : vector<16x96xf32> to vector<8x16xf32>
    %136 = arith.truncf %135 : vector<8x16xf32> to vector<8x16xbf16>
    %cst_37 = arith.constant dense<0.000000e+00> : vector<8x8xf32>
    %137 = tpu.matmul %132, %134, %cst_37 {dimension_numbers = #tpu.dot_dimension_numbers<[1], [1], [0], [0], [0, 0, 1, 0], [], []>} : vector<8x16xbf16>, vector<8x16xbf16>, vector<8x8xf32> -> vector<8x8xf32>
    %cst_38 = arith.constant 2.500000e-01 : f32
    %138 = vector.broadcast %cst_38 : f32 to vector<8x8xf32>
    %139 = arith.mulf %137, %138 : vector<8x8xf32>
    %140 = vector.broadcast %102 : vector<1x8xf32> to vector<8x8xf32>
    %141 = arith.addf %139, %140 : vector<8x8xf32>
    %cst_39 = arith.constant dense<0xFF800000> : vector<8xf32>
    %142 = vector.multi_reduction <maximumf>, %141, %cst_39 [1] : vector<8x8xf32> to vector<8xf32>
    %143 = vector.shape_cast %142 : vector<8xf32> to vector<8x1xf32>
    %144 = vector.broadcast %143 : vector<8x1xf32> to vector<8x8xf32>
    %145 = arith.subf %141, %144 : vector<8x8xf32>
    %146 = math.exp %145 : vector<8x8xf32>
    %cst_40 = arith.constant dense<0.000000e+00> : vector<8xf32>
    %147 = vector.multi_reduction <add>, %146, %cst_40 [1] : vector<8x8xf32> to vector<8xf32>
    %148 = vector.shape_cast %147 : vector<8xf32> to vector<8x1xf32>
    %149 = tpu.reciprocal %148 {approx = true} : vector<8x1xf32> -> vector<8x1xf32>
    %150 = vector.broadcast %149 : vector<8x1xf32> to vector<8x8xf32>
    %151 = arith.mulf %146, %150 : vector<8x8xf32>
    %152 = arith.truncf %151 : vector<8x8xf32> to vector<8x8xbf16>
    %cst_41 = arith.constant dense<0.000000e+00> : vector<8x16xf32>
    %153 = tpu.matmul %152, %136, %cst_41 {dimension_numbers = #tpu.dot_dimension_numbers<[1], [0], [0], [1], [0, 0, 1, 1], [], []>} : vector<8x8xbf16>, vector<8x16xbf16>, vector<8x16xf32> -> vector<8x16xf32>
    %154 = vector.extract_strided_slice %31 {offsets = [16, 0], sizes = [16, 32], strides = [1, 1]} : vector<32x32xbf16> to vector<16x32xbf16>
    %155 = arith.truncf %153 : vector<8x16xf32> to vector<8x16xbf16>
    %cst_42 = arith.constant dense<0.000000e+00> : vector<8x32xf32>
    %156 = tpu.matmul %155, %154, %cst_42 {dimension_numbers = #tpu.dot_dimension_numbers<[1], [0], [0], [1], [0, 0, 1, 1], [], []>} : vector<8x16xbf16>, vector<16x32xbf16>, vector<8x32xf32> -> vector<8x32xf32>
    %157 = arith.addf %130, %156 : vector<8x32xf32>
    %158 = tpu.concatenate %101, %157 in 0 : vector<8x32xf32>, vector<8x32xf32> -> vector<16x32xf32>
    %159 = vector.broadcast %35 : vector<1x32xf32> to vector<16x32xf32>
    %160 = arith.addf %158, %159 : vector<16x32xf32>
    %161 = arith.addf %24, %160 : vector<16x32xf32>
    %cst_43 = arith.constant dense<0.000000e+00> : vector<16xf32>
    %162 = vector.multi_reduction <add>, %161, %cst_43 [1] : vector<16x32xf32> to vector<16xf32>
    %163 = vector.shape_cast %162 : vector<16xf32> to vector<16x1xf32>
    %cst_44 = arith.constant 3.200000e+01 : f32
    %164 = vector.broadcast %cst_44 : f32 to vector<16x1xf32>
    %165 = arith.divf %163, %164 : vector<16x1xf32>
    %166 = vector.broadcast %165 : vector<16x1xf32> to vector<16x32xf32>
    %167 = arith.subf %161, %166 : vector<16x32xf32>
    %168 = arith.mulf %167, %167 : vector<16x32xf32>
    %cst_45 = arith.constant dense<0.000000e+00> : vector<16xf32>
    %169 = vector.multi_reduction <add>, %168, %cst_45 [1] : vector<16x32xf32> to vector<16xf32>
    %170 = vector.shape_cast %169 : vector<16xf32> to vector<16x1xf32>
    %cst_46 = arith.constant 3.200000e+01 : f32
    %171 = vector.broadcast %cst_46 : f32 to vector<16x1xf32>
    %172 = arith.divf %170, %171 : vector<16x1xf32>
    %173 = vector.broadcast %165 : vector<16x1xf32> to vector<16x32xf32>
    %174 = arith.subf %161, %173 : vector<16x32xf32>
    %cst_47 = arith.constant 9.99999996E-13 : f32
    %175 = vector.broadcast %cst_47 : f32 to vector<16x1xf32>
    %176 = arith.addf %172, %175 : vector<16x1xf32>
    %177 = math.rsqrt %176 : vector<16x1xf32>
    %178 = vector.broadcast %177 : vector<16x1xf32> to vector<16x32xf32>
    %179 = arith.mulf %174, %178 : vector<16x32xf32>
    %180 = vector.broadcast %38 : vector<1x32xf32> to vector<16x32xf32>
    %181 = arith.mulf %179, %180 : vector<16x32xf32>
    %182 = vector.broadcast %39 : vector<1x32xf32> to vector<16x32xf32>
    %183 = arith.addf %181, %182 : vector<16x32xf32>
    %184 = arith.truncf %183 : vector<16x32xf32> to vector<16x32xbf16>
    %cst_48 = arith.constant dense<0.000000e+00> : vector<16x64xf32>
    %185 = tpu.matmul %184, %32, %cst_48 {dimension_numbers = #tpu.dot_dimension_numbers<[1], [0], [0], [1], [0, 0, 1, 1], [], []>} : vector<16x32xbf16>, vector<32x64xbf16>, vector<16x64xf32> -> vector<16x64xf32>
    %186 = vector.broadcast %36 : vector<1x64xf32> to vector<16x64xf32>
    %187 = arith.addf %185, %186 : vector<16x64xf32>
    %188 = arith.mulf %187, %187 : vector<16x64xf32>
    %189 = arith.mulf %187, %188 : vector<16x64xf32>
    %cst_49 = arith.constant 4.471500e-02 : f32
    %190 = vector.broadcast %cst_49 : f32 to vector<16x64xf32>
    %191 = arith.mulf %190, %189 : vector<16x64xf32>
    %192 = arith.addf %187, %191 : vector<16x64xf32>
    %cst_50 = arith.constant 0.797884583 : f32
    %193 = vector.broadcast %cst_50 : f32 to vector<16x64xf32>
    %194 = arith.mulf %193, %192 : vector<16x64xf32>
    %195 = math.tanh %194 : vector<16x64xf32>
    %cst_51 = arith.constant 1.000000e+00 : f32
    %196 = vector.broadcast %cst_51 : f32 to vector<16x64xf32>
    %197 = arith.addf %196, %195 : vector<16x64xf32>
    %cst_52 = arith.constant 5.000000e-01 : f32
    %198 = vector.broadcast %cst_52 : f32 to vector<16x64xf32>
    %199 = arith.mulf %198, %197 : vector<16x64xf32>
    %200 = arith.mulf %187, %199 : vector<16x64xf32>
    %201 = arith.truncf %200 : vector<16x64xf32> to vector<16x64xbf16>
    %cst_53 = arith.constant dense<0.000000e+00> : vector<16x32xf32>
    %202 = tpu.matmul %201, %33, %cst_53 {dimension_numbers = #tpu.dot_dimension_numbers<[1], [0], [0], [1], [0, 0, 1, 1], [], []>} : vector<16x64xbf16>, vector<64x32xbf16>, vector<16x32xf32> -> vector<16x32xf32>
    %203 = vector.broadcast %37 : vector<1x32xf32> to vector<16x32xf32>
    %204 = arith.addf %202, %203 : vector<16x32xf32>
    %205 = arith.addf %183, %204 : vector<16x32xf32>
    %cst_54 = arith.constant dense<0.000000e+00> : vector<16xf32>
    %206 = vector.multi_reduction <add>, %205, %cst_54 [1] : vector<16x32xf32> to vector<16xf32>
    %207 = vector.shape_cast %206 : vector<16xf32> to vector<16x1xf32>
    %cst_55 = arith.constant 3.200000e+01 : f32
    %208 = vector.broadcast %cst_55 : f32 to vector<16x1xf32>
    %209 = arith.divf %207, %208 : vector<16x1xf32>
    %210 = vector.broadcast %209 : vector<16x1xf32> to vector<16x32xf32>
    %211 = arith.subf %205, %210 : vector<16x32xf32>
    %212 = arith.mulf %211, %211 : vector<16x32xf32>
    %cst_56 = arith.constant dense<0.000000e+00> : vector<16xf32>
    %213 = vector.multi_reduction <add>, %212, %cst_56 [1] : vector<16x32xf32> to vector<16xf32>
    %214 = vector.shape_cast %213 : vector<16xf32> to vector<16x1xf32>
    %cst_57 = arith.constant 3.200000e+01 : f32
    %215 = vector.broadcast %cst_57 : f32 to vector<16x1xf32>
    %216 = arith.divf %214, %215 : vector<16x1xf32>
    %217 = vector.broadcast %209 : vector<16x1xf32> to vector<16x32xf32>
    %218 = arith.subf %205, %217 : vector<16x32xf32>
    %cst_58 = arith.constant 9.99999996E-13 : f32
    %219 = vector.broadcast %cst_58 : f32 to vector<16x1xf32>
    %220 = arith.addf %216, %219 : vector<16x1xf32>
    %221 = math.rsqrt %220 : vector<16x1xf32>
    %222 = vector.broadcast %221 : vector<16x1xf32> to vector<16x32xf32>
    %223 = arith.mulf %218, %222 : vector<16x32xf32>
    %224 = vector.broadcast %40 : vector<1x32xf32> to vector<16x32xf32>
    %225 = arith.mulf %223, %224 : vector<16x32xf32>
    %226 = vector.broadcast %41 : vector<1x32xf32> to vector<16x32xf32>
    %227 = arith.addf %225, %226 : vector<16x32xf32>
    %c1_59 = arith.constant 1 : index
    %c0_60 = arith.constant 0 : index
    %c0_61 = arith.constant 0 : index
    %228 = vector.load %arg2[%c1_59, %c0_60, %c0_61] : memref<2x64x224xbf16, #tpu.memory_space<vmem>>, vector<1x64x224xbf16>
    %229 = vector.shape_cast %228 : vector<1x64x224xbf16> to vector<64x224xbf16>
    %c1_62 = arith.constant 1 : index
    %c0_63 = arith.constant 0 : index
    %c0_64 = arith.constant 0 : index
    %230 = vector.load %arg3[%c1_62, %c0_63, %c0_64] : memref<2x8x96xf32, #tpu.memory_space<vmem>>, vector<1x8x96xf32>
    %231 = vector.shape_cast %230 : vector<1x8x96xf32> to vector<8x96xf32>
    %232 = vector.extract_strided_slice %229 {offsets = [0, 0], sizes = [32, 96], strides = [1, 1]} : vector<64x224xbf16> to vector<32x96xbf16>
    %233 = vector.extract_strided_slice %229 {offsets = [0, 96], sizes = [32, 32], strides = [1, 1]} : vector<64x224xbf16> to vector<32x32xbf16>
    %234 = vector.extract_strided_slice %229 {offsets = [0, 128], sizes = [32, 64], strides = [1, 1]} : vector<64x224xbf16> to vector<32x64xbf16>
    %235 = vector.extract_strided_slice %229 {offsets = [0, 192], sizes = [64, 32], strides = [1, 1]} : vector<64x224xbf16> to vector<64x32xbf16>
    %236 = vector.extract_strided_slice %231 {offsets = [0, 0], sizes = [1, 96], strides = [1, 1]} : vector<8x96xf32> to vector<1x96xf32>
    %237 = vector.extract_strided_slice %231 {offsets = [1, 0], sizes = [1, 32], strides = [1, 1]} : vector<8x96xf32> to vector<1x32xf32>
    %238 = vector.extract_strided_slice %231 {offsets = [2, 0], sizes = [1, 64], strides = [1, 1]} : vector<8x96xf32> to vector<1x64xf32>
    %239 = vector.extract_strided_slice %231 {offsets = [3, 0], sizes = [1, 32], strides = [1, 1]} : vector<8x96xf32> to vector<1x32xf32>
    %240 = vector.extract_strided_slice %231 {offsets = [4, 0], sizes = [1, 32], strides = [1, 1]} : vector<8x96xf32> to vector<1x32xf32>
    %241 = vector.extract_strided_slice %231 {offsets = [5, 0], sizes = [1, 32], strides = [1, 1]} : vector<8x96xf32> to vector<1x32xf32>
    %242 = vector.extract_strided_slice %231 {offsets = [6, 0], sizes = [1, 32], strides = [1, 1]} : vector<8x96xf32> to vector<1x32xf32>
    %243 = vector.extract_strided_slice %231 {offsets = [7, 0], sizes = [1, 32], strides = [1, 1]} : vector<8x96xf32> to vector<1x32xf32>
    %244 = arith.truncf %227 : vector<16x32xf32> to vector<16x32xbf16>
    %cst_65 = arith.constant dense<0.000000e+00> : vector<16x96xf32>
    %245 = tpu.matmul %244, %232, %cst_65 {dimension_numbers = #tpu.dot_dimension_numbers<[1], [0], [0], [1], [0, 0, 1, 1], [], []>} : vector<16x32xbf16>, vector<32x96xbf16>, vector<16x96xf32> -> vector<16x96xf32>
    %246 = vector.broadcast %236 : vector<1x96xf32> to vector<16x96xf32>
    %247 = arith.addf %245, %246 : vector<16x96xf32>
    %248 = vector.extract_strided_slice %25 {offsets = [0, 0], sizes = [1, 8], strides = [1, 1]} : vector<2x8xf32> to vector<1x8xf32>
    %cst_66 = arith.constant 0.000000e+00 : f32
    %249 = vector.broadcast %cst_66 : f32 to vector<8x32xf32>
    %250 = vector.extract_strided_slice %247 {offsets = [0, 0], sizes = [8, 16], strides = [1, 1]} : vector<16x96xf32> to vector<8x16xf32>
    %251 = arith.truncf %250 : vector<8x16xf32> to vector<8x16xbf16>
    %252 = vector.extract_strided_slice %247 {offsets = [0, 32], sizes = [8, 16], strides = [1, 1]} : vector<16x96xf32> to vector<8x16xf32>
    %253 = arith.truncf %252 : vector<8x16xf32> to vector<8x16xbf16>
    %254 = vector.extract_strided_slice %247 {offsets = [0, 64], sizes = [8, 16], strides = [1, 1]} : vector<16x96xf32> to vector<8x16xf32>
    %255 = arith.truncf %254 : vector<8x16xf32> to vector<8x16xbf16>
    %cst_67 = arith.constant dense<0.000000e+00> : vector<8x8xf32>
    %256 = tpu.matmul %251, %253, %cst_67 {dimension_numbers = #tpu.dot_dimension_numbers<[1], [1], [0], [0], [0, 0, 1, 0], [], []>} : vector<8x16xbf16>, vector<8x16xbf16>, vector<8x8xf32> -> vector<8x8xf32>
    %cst_68 = arith.constant 2.500000e-01 : f32
    %257 = vector.broadcast %cst_68 : f32 to vector<8x8xf32>
    %258 = arith.mulf %256, %257 : vector<8x8xf32>
    %259 = vector.broadcast %248 : vector<1x8xf32> to vector<8x8xf32>
    %260 = arith.addf %258, %259 : vector<8x8xf32>
    %cst_69 = arith.constant dense<0xFF800000> : vector<8xf32>
    %261 = vector.multi_reduction <maximumf>, %260, %cst_69 [1] : vector<8x8xf32> to vector<8xf32>
    %262 = vector.shape_cast %261 : vector<8xf32> to vector<8x1xf32>
    %263 = vector.broadcast %262 : vector<8x1xf32> to vector<8x8xf32>
    %264 = arith.subf %260, %263 : vector<8x8xf32>
    %265 = math.exp %264 : vector<8x8xf32>
    %cst_70 = arith.constant dense<0.000000e+00> : vector<8xf32>
    %266 = vector.multi_reduction <add>, %265, %cst_70 [1] : vector<8x8xf32> to vector<8xf32>
    %267 = vector.shape_cast %266 : vector<8xf32> to vector<8x1xf32>
    %268 = tpu.reciprocal %267 {approx = true} : vector<8x1xf32> -> vector<8x1xf32>
    %269 = vector.broadcast %268 : vector<8x1xf32> to vector<8x8xf32>
    %270 = arith.mulf %265, %269 : vector<8x8xf32>
    %271 = arith.truncf %270 : vector<8x8xf32> to vector<8x8xbf16>
    %cst_71 = arith.constant dense<0.000000e+00> : vector<8x16xf32>
    %272 = tpu.matmul %271, %255, %cst_71 {dimension_numbers = #tpu.dot_dimension_numbers<[1], [0], [0], [1], [0, 0, 1, 1], [], []>} : vector<8x8xbf16>, vector<8x16xbf16>, vector<8x16xf32> -> vector<8x16xf32>
    %273 = vector.extract_strided_slice %233 {offsets = [0, 0], sizes = [16, 32], strides = [1, 1]} : vector<32x32xbf16> to vector<16x32xbf16>
    %274 = arith.truncf %272 : vector<8x16xf32> to vector<8x16xbf16>
    %cst_72 = arith.constant dense<0.000000e+00> : vector<8x32xf32>
    %275 = tpu.matmul %274, %273, %cst_72 {dimension_numbers = #tpu.dot_dimension_numbers<[1], [0], [0], [1], [0, 0, 1, 1], [], []>} : vector<8x16xbf16>, vector<16x32xbf16>, vector<8x32xf32> -> vector<8x32xf32>
    %276 = arith.addf %249, %275 : vector<8x32xf32>
    %277 = vector.extract_strided_slice %247 {offsets = [0, 16], sizes = [8, 16], strides = [1, 1]} : vector<16x96xf32> to vector<8x16xf32>
    %278 = arith.truncf %277 : vector<8x16xf32> to vector<8x16xbf16>
    %279 = vector.extract_strided_slice %247 {offsets = [0, 48], sizes = [8, 16], strides = [1, 1]} : vector<16x96xf32> to vector<8x16xf32>
    %280 = arith.truncf %279 : vector<8x16xf32> to vector<8x16xbf16>
    %281 = vector.extract_strided_slice %247 {offsets = [0, 80], sizes = [8, 16], strides = [1, 1]} : vector<16x96xf32> to vector<8x16xf32>
    %282 = arith.truncf %281 : vector<8x16xf32> to vector<8x16xbf16>
    %cst_73 = arith.constant dense<0.000000e+00> : vector<8x8xf32>
    %283 = tpu.matmul %278, %280, %cst_73 {dimension_numbers = #tpu.dot_dimension_numbers<[1], [1], [0], [0], [0, 0, 1, 0], [], []>} : vector<8x16xbf16>, vector<8x16xbf16>, vector<8x8xf32> -> vector<8x8xf32>
    %cst_74 = arith.constant 2.500000e-01 : f32
    %284 = vector.broadcast %cst_74 : f32 to vector<8x8xf32>
    %285 = arith.mulf %283, %284 : vector<8x8xf32>
    %286 = vector.broadcast %248 : vector<1x8xf32> to vector<8x8xf32>
    %287 = arith.addf %285, %286 : vector<8x8xf32>
    %cst_75 = arith.constant dense<0xFF800000> : vector<8xf32>
    %288 = vector.multi_reduction <maximumf>, %287, %cst_75 [1] : vector<8x8xf32> to vector<8xf32>
    %289 = vector.shape_cast %288 : vector<8xf32> to vector<8x1xf32>
    %290 = vector.broadcast %289 : vector<8x1xf32> to vector<8x8xf32>
    %291 = arith.subf %287, %290 : vector<8x8xf32>
    %292 = math.exp %291 : vector<8x8xf32>
    %cst_76 = arith.constant dense<0.000000e+00> : vector<8xf32>
    %293 = vector.multi_reduction <add>, %292, %cst_76 [1] : vector<8x8xf32> to vector<8xf32>
    %294 = vector.shape_cast %293 : vector<8xf32> to vector<8x1xf32>
    %295 = tpu.reciprocal %294 {approx = true} : vector<8x1xf32> -> vector<8x1xf32>
    %296 = vector.broadcast %295 : vector<8x1xf32> to vector<8x8xf32>
    %297 = arith.mulf %292, %296 : vector<8x8xf32>
    %298 = arith.truncf %297 : vector<8x8xf32> to vector<8x8xbf16>
    %cst_77 = arith.constant dense<0.000000e+00> : vector<8x16xf32>
    %299 = tpu.matmul %298, %282, %cst_77 {dimension_numbers = #tpu.dot_dimension_numbers<[1], [0], [0], [1], [0, 0, 1, 1], [], []>} : vector<8x8xbf16>, vector<8x16xbf16>, vector<8x16xf32> -> vector<8x16xf32>
    %300 = vector.extract_strided_slice %233 {offsets = [16, 0], sizes = [16, 32], strides = [1, 1]} : vector<32x32xbf16> to vector<16x32xbf16>
    %301 = arith.truncf %299 : vector<8x16xf32> to vector<8x16xbf16>
    %cst_78 = arith.constant dense<0.000000e+00> : vector<8x32xf32>
    %302 = tpu.matmul %301, %300, %cst_78 {dimension_numbers = #tpu.dot_dimension_numbers<[1], [0], [0], [1], [0, 0, 1, 1], [], []>} : vector<8x16xbf16>, vector<16x32xbf16>, vector<8x32xf32> -> vector<8x32xf32>
    %303 = arith.addf %276, %302 : vector<8x32xf32>
    %304 = vector.extract_strided_slice %25 {offsets = [1, 0], sizes = [1, 8], strides = [1, 1]} : vector<2x8xf32> to vector<1x8xf32>
    %cst_79 = arith.constant 0.000000e+00 : f32
    %305 = vector.broadcast %cst_79 : f32 to vector<8x32xf32>
    %306 = vector.extract_strided_slice %247 {offsets = [8, 0], sizes = [8, 16], strides = [1, 1]} : vector<16x96xf32> to vector<8x16xf32>
    %307 = arith.truncf %306 : vector<8x16xf32> to vector<8x16xbf16>
    %308 = vector.extract_strided_slice %247 {offsets = [8, 32], sizes = [8, 16], strides = [1, 1]} : vector<16x96xf32> to vector<8x16xf32>
    %309 = arith.truncf %308 : vector<8x16xf32> to vector<8x16xbf16>
    %310 = vector.extract_strided_slice %247 {offsets = [8, 64], sizes = [8, 16], strides = [1, 1]} : vector<16x96xf32> to vector<8x16xf32>
    %311 = arith.truncf %310 : vector<8x16xf32> to vector<8x16xbf16>
    %cst_80 = arith.constant dense<0.000000e+00> : vector<8x8xf32>
    %312 = tpu.matmul %307, %309, %cst_80 {dimension_numbers = #tpu.dot_dimension_numbers<[1], [1], [0], [0], [0, 0, 1, 0], [], []>} : vector<8x16xbf16>, vector<8x16xbf16>, vector<8x8xf32> -> vector<8x8xf32>
    %cst_81 = arith.constant 2.500000e-01 : f32
    %313 = vector.broadcast %cst_81 : f32 to vector<8x8xf32>
    %314 = arith.mulf %312, %313 : vector<8x8xf32>
    %315 = vector.broadcast %304 : vector<1x8xf32> to vector<8x8xf32>
    %316 = arith.addf %314, %315 : vector<8x8xf32>
    %cst_82 = arith.constant dense<0xFF800000> : vector<8xf32>
    %317 = vector.multi_reduction <maximumf>, %316, %cst_82 [1] : vector<8x8xf32> to vector<8xf32>
    %318 = vector.shape_cast %317 : vector<8xf32> to vector<8x1xf32>
    %319 = vector.broadcast %318 : vector<8x1xf32> to vector<8x8xf32>
    %320 = arith.subf %316, %319 : vector<8x8xf32>
    %321 = math.exp %320 : vector<8x8xf32>
    %cst_83 = arith.constant dense<0.000000e+00> : vector<8xf32>
    %322 = vector.multi_reduction <add>, %321, %cst_83 [1] : vector<8x8xf32> to vector<8xf32>
    %323 = vector.shape_cast %322 : vector<8xf32> to vector<8x1xf32>
    %324 = tpu.reciprocal %323 {approx = true} : vector<8x1xf32> -> vector<8x1xf32>
    %325 = vector.broadcast %324 : vector<8x1xf32> to vector<8x8xf32>
    %326 = arith.mulf %321, %325 : vector<8x8xf32>
    %327 = arith.truncf %326 : vector<8x8xf32> to vector<8x8xbf16>
    %cst_84 = arith.constant dense<0.000000e+00> : vector<8x16xf32>
    %328 = tpu.matmul %327, %311, %cst_84 {dimension_numbers = #tpu.dot_dimension_numbers<[1], [0], [0], [1], [0, 0, 1, 1], [], []>} : vector<8x8xbf16>, vector<8x16xbf16>, vector<8x16xf32> -> vector<8x16xf32>
    %329 = vector.extract_strided_slice %233 {offsets = [0, 0], sizes = [16, 32], strides = [1, 1]} : vector<32x32xbf16> to vector<16x32xbf16>
    %330 = arith.truncf %328 : vector<8x16xf32> to vector<8x16xbf16>
    %cst_85 = arith.constant dense<0.000000e+00> : vector<8x32xf32>
    %331 = tpu.matmul %330, %329, %cst_85 {dimension_numbers = #tpu.dot_dimension_numbers<[1], [0], [0], [1], [0, 0, 1, 1], [], []>} : vector<8x16xbf16>, vector<16x32xbf16>, vector<8x32xf32> -> vector<8x32xf32>
    %332 = arith.addf %305, %331 : vector<8x32xf32>
    %333 = vector.extract_strided_slice %247 {offsets = [8, 16], sizes = [8, 16], strides = [1, 1]} : vector<16x96xf32> to vector<8x16xf32>
    %334 = arith.truncf %333 : vector<8x16xf32> to vector<8x16xbf16>
    %335 = vector.extract_strided_slice %247 {offsets = [8, 48], sizes = [8, 16], strides = [1, 1]} : vector<16x96xf32> to vector<8x16xf32>
    %336 = arith.truncf %335 : vector<8x16xf32> to vector<8x16xbf16>
    %337 = vector.extract_strided_slice %247 {offsets = [8, 80], sizes = [8, 16], strides = [1, 1]} : vector<16x96xf32> to vector<8x16xf32>
    %338 = arith.truncf %337 : vector<8x16xf32> to vector<8x16xbf16>
    %cst_86 = arith.constant dense<0.000000e+00> : vector<8x8xf32>
    %339 = tpu.matmul %334, %336, %cst_86 {dimension_numbers = #tpu.dot_dimension_numbers<[1], [1], [0], [0], [0, 0, 1, 0], [], []>} : vector<8x16xbf16>, vector<8x16xbf16>, vector<8x8xf32> -> vector<8x8xf32>
    %cst_87 = arith.constant 2.500000e-01 : f32
    %340 = vector.broadcast %cst_87 : f32 to vector<8x8xf32>
    %341 = arith.mulf %339, %340 : vector<8x8xf32>
    %342 = vector.broadcast %304 : vector<1x8xf32> to vector<8x8xf32>
    %343 = arith.addf %341, %342 : vector<8x8xf32>
    %cst_88 = arith.constant dense<0xFF800000> : vector<8xf32>
    %344 = vector.multi_reduction <maximumf>, %343, %cst_88 [1] : vector<8x8xf32> to vector<8xf32>
    %345 = vector.shape_cast %344 : vector<8xf32> to vector<8x1xf32>
    %346 = vector.broadcast %345 : vector<8x1xf32> to vector<8x8xf32>
    %347 = arith.subf %343, %346 : vector<8x8xf32>
    %348 = math.exp %347 : vector<8x8xf32>
    %cst_89 = arith.constant dense<0.000000e+00> : vector<8xf32>
    %349 = vector.multi_reduction <add>, %348, %cst_89 [1] : vector<8x8xf32> to vector<8xf32>
    %350 = vector.shape_cast %349 : vector<8xf32> to vector<8x1xf32>
    %351 = tpu.reciprocal %350 {approx = true} : vector<8x1xf32> -> vector<8x1xf32>
    %352 = vector.broadcast %351 : vector<8x1xf32> to vector<8x8xf32>
    %353 = arith.mulf %348, %352 : vector<8x8xf32>
    %354 = arith.truncf %353 : vector<8x8xf32> to vector<8x8xbf16>
    %cst_90 = arith.constant dense<0.000000e+00> : vector<8x16xf32>
    %355 = tpu.matmul %354, %338, %cst_90 {dimension_numbers = #tpu.dot_dimension_numbers<[1], [0], [0], [1], [0, 0, 1, 1], [], []>} : vector<8x8xbf16>, vector<8x16xbf16>, vector<8x16xf32> -> vector<8x16xf32>
    %356 = vector.extract_strided_slice %233 {offsets = [16, 0], sizes = [16, 32], strides = [1, 1]} : vector<32x32xbf16> to vector<16x32xbf16>
    %357 = arith.truncf %355 : vector<8x16xf32> to vector<8x16xbf16>
    %cst_91 = arith.constant dense<0.000000e+00> : vector<8x32xf32>
    %358 = tpu.matmul %357, %356, %cst_91 {dimension_numbers = #tpu.dot_dimension_numbers<[1], [0], [0], [1], [0, 0, 1, 1], [], []>} : vector<8x16xbf16>, vector<16x32xbf16>, vector<8x32xf32> -> vector<8x32xf32>
    %359 = arith.addf %332, %358 : vector<8x32xf32>
    %360 = tpu.concatenate %303, %359 in 0 : vector<8x32xf32>, vector<8x32xf32> -> vector<16x32xf32>
    %361 = vector.broadcast %237 : vector<1x32xf32> to vector<16x32xf32>
    %362 = arith.addf %360, %361 : vector<16x32xf32>
    %363 = arith.addf %227, %362 : vector<16x32xf32>
    %cst_92 = arith.constant dense<0.000000e+00> : vector<16xf32>
    %364 = vector.multi_reduction <add>, %363, %cst_92 [1] : vector<16x32xf32> to vector<16xf32>
    %365 = vector.shape_cast %364 : vector<16xf32> to vector<16x1xf32>
    %cst_93 = arith.constant 3.200000e+01 : f32
    %366 = vector.broadcast %cst_93 : f32 to vector<16x1xf32>
    %367 = arith.divf %365, %366 : vector<16x1xf32>
    %368 = vector.broadcast %367 : vector<16x1xf32> to vector<16x32xf32>
    %369 = arith.subf %363, %368 : vector<16x32xf32>
    %370 = arith.mulf %369, %369 : vector<16x32xf32>
    %cst_94 = arith.constant dense<0.000000e+00> : vector<16xf32>
    %371 = vector.multi_reduction <add>, %370, %cst_94 [1] : vector<16x32xf32> to vector<16xf32>
    %372 = vector.shape_cast %371 : vector<16xf32> to vector<16x1xf32>
    %cst_95 = arith.constant 3.200000e+01 : f32
    %373 = vector.broadcast %cst_95 : f32 to vector<16x1xf32>
    %374 = arith.divf %372, %373 : vector<16x1xf32>
    %375 = vector.broadcast %367 : vector<16x1xf32> to vector<16x32xf32>
    %376 = arith.subf %363, %375 : vector<16x32xf32>
    %cst_96 = arith.constant 9.99999996E-13 : f32
    %377 = vector.broadcast %cst_96 : f32 to vector<16x1xf32>
    %378 = arith.addf %374, %377 : vector<16x1xf32>
    %379 = math.rsqrt %378 : vector<16x1xf32>
    %380 = vector.broadcast %379 : vector<16x1xf32> to vector<16x32xf32>
    %381 = arith.mulf %376, %380 : vector<16x32xf32>
    %382 = vector.broadcast %240 : vector<1x32xf32> to vector<16x32xf32>
    %383 = arith.mulf %381, %382 : vector<16x32xf32>
    %384 = vector.broadcast %241 : vector<1x32xf32> to vector<16x32xf32>
    %385 = arith.addf %383, %384 : vector<16x32xf32>
    %386 = arith.truncf %385 : vector<16x32xf32> to vector<16x32xbf16>
    %cst_97 = arith.constant dense<0.000000e+00> : vector<16x64xf32>
    %387 = tpu.matmul %386, %234, %cst_97 {dimension_numbers = #tpu.dot_dimension_numbers<[1], [0], [0], [1], [0, 0, 1, 1], [], []>} : vector<16x32xbf16>, vector<32x64xbf16>, vector<16x64xf32> -> vector<16x64xf32>
    %388 = vector.broadcast %238 : vector<1x64xf32> to vector<16x64xf32>
    %389 = arith.addf %387, %388 : vector<16x64xf32>
    %390 = arith.mulf %389, %389 : vector<16x64xf32>
    %391 = arith.mulf %389, %390 : vector<16x64xf32>
    %cst_98 = arith.constant 4.471500e-02 : f32
    %392 = vector.broadcast %cst_98 : f32 to vector<16x64xf32>
    %393 = arith.mulf %392, %391 : vector<16x64xf32>
    %394 = arith.addf %389, %393 : vector<16x64xf32>
    %cst_99 = arith.constant 0.797884583 : f32
    %395 = vector.broadcast %cst_99 : f32 to vector<16x64xf32>
    %396 = arith.mulf %395, %394 : vector<16x64xf32>
    %397 = math.tanh %396 : vector<16x64xf32>
    %cst_100 = arith.constant 1.000000e+00 : f32
    %398 = vector.broadcast %cst_100 : f32 to vector<16x64xf32>
    %399 = arith.addf %398, %397 : vector<16x64xf32>
    %cst_101 = arith.constant 5.000000e-01 : f32
    %400 = vector.broadcast %cst_101 : f32 to vector<16x64xf32>
    %401 = arith.mulf %400, %399 : vector<16x64xf32>
    %402 = arith.mulf %389, %401 : vector<16x64xf32>
    %403 = arith.truncf %402 : vector<16x64xf32> to vector<16x64xbf16>
    %cst_102 = arith.constant dense<0.000000e+00> : vector<16x32xf32>
    %404 = tpu.matmul %403, %235, %cst_102 {dimension_numbers = #tpu.dot_dimension_numbers<[1], [0], [0], [1], [0, 0, 1, 1], [], []>} : vector<16x64xbf16>, vector<64x32xbf16>, vector<16x32xf32> -> vector<16x32xf32>
    %405 = vector.broadcast %239 : vector<1x32xf32> to vector<16x32xf32>
    %406 = arith.addf %404, %405 : vector<16x32xf32>
    %407 = arith.addf %385, %406 : vector<16x32xf32>
    %cst_103 = arith.constant dense<0.000000e+00> : vector<16xf32>
    %408 = vector.multi_reduction <add>, %407, %cst_103 [1] : vector<16x32xf32> to vector<16xf32>
    %409 = vector.shape_cast %408 : vector<16xf32> to vector<16x1xf32>
    %cst_104 = arith.constant 3.200000e+01 : f32
    %410 = vector.broadcast %cst_104 : f32 to vector<16x1xf32>
    %411 = arith.divf %409, %410 : vector<16x1xf32>
    %412 = vector.broadcast %411 : vector<16x1xf32> to vector<16x32xf32>
    %413 = arith.subf %407, %412 : vector<16x32xf32>
    %414 = arith.mulf %413, %413 : vector<16x32xf32>
    %cst_105 = arith.constant dense<0.000000e+00> : vector<16xf32>
    %415 = vector.multi_reduction <add>, %414, %cst_105 [1] : vector<16x32xf32> to vector<16xf32>
    %416 = vector.shape_cast %415 : vector<16xf32> to vector<16x1xf32>
    %cst_106 = arith.constant 3.200000e+01 : f32
    %417 = vector.broadcast %cst_106 : f32 to vector<16x1xf32>
    %418 = arith.divf %416, %417 : vector<16x1xf32>
    %419 = vector.broadcast %411 : vector<16x1xf32> to vector<16x32xf32>
    %420 = arith.subf %407, %419 : vector<16x32xf32>
    %cst_107 = arith.constant 9.99999996E-13 : f32
    %421 = vector.broadcast %cst_107 : f32 to vector<16x1xf32>
    %422 = arith.addf %418, %421 : vector<16x1xf32>
    %423 = math.rsqrt %422 : vector<16x1xf32>
    %424 = vector.broadcast %423 : vector<16x1xf32> to vector<16x32xf32>
    %425 = arith.mulf %420, %424 : vector<16x32xf32>
    %426 = vector.broadcast %242 : vector<1x32xf32> to vector<16x32xf32>
    %427 = arith.mulf %425, %426 : vector<16x32xf32>
    %428 = vector.broadcast %243 : vector<1x32xf32> to vector<16x32xf32>
    %429 = arith.addf %427, %428 : vector<16x32xf32>
    %430 = vector.extract_strided_slice %429 {offsets = [0, 0], sizes = [1, 32], strides = [1, 1]} : vector<16x32xf32> to vector<1x32xf32>
    %431 = vector.extract_strided_slice %429 {offsets = [8, 0], sizes = [1, 32], strides = [1, 1]} : vector<16x32xf32> to vector<1x32xf32>
    %432 = tpu.concatenate %430, %431 in 0 : vector<1x32xf32>, vector<1x32xf32> -> vector<2x32xf32>
    %c0_108 = arith.constant 0 : index
    %c0_109 = arith.constant 0 : index
    %433 = vector.load %arg4[%c0_108, %c0_109] : memref<32x160xbf16, #tpu.memory_space<vmem>>, vector<32x32xbf16>
    %c0_110 = arith.constant 0 : index
    %c32 = arith.constant 32 : index
    %434 = vector.load %arg4[%c0_110, %c32] : memref<32x160xbf16, #tpu.memory_space<vmem>>, vector<32x128xbf16>
    %c2 = arith.constant 2 : index
    %c0_111 = arith.constant 0 : index
    %435 = vector.load %arg5[%c2, %c0_111] : memref<4x128xf32, #tpu.memory_space<vmem>>, vector<1x32xf32>
    %c3 = arith.constant 3 : index
    %c0_112 = arith.constant 0 : index
    %436 = vector.load %arg5[%c3, %c0_112] : memref<4x128xf32, #tpu.memory_space<vmem>>, vector<1x128xf32>
    %437 = arith.truncf %432 : vector<2x32xf32> to vector<2x32xbf16>
    %cst_113 = arith.constant dense<0.000000e+00> : vector<2x32xf32>
    %438 = tpu.matmul %437, %433, %cst_113 {dimension_numbers = #tpu.dot_dimension_numbers<[1], [0], [0], [1], [0, 0, 1, 1], [], []>} : vector<2x32xbf16>, vector<32x32xbf16>, vector<2x32xf32> -> vector<2x32xf32>
    %439 = vector.broadcast %435 : vector<1x32xf32> to vector<2x32xf32>
    %440 = arith.addf %438, %439 : vector<2x32xf32>
    %441 = math.tanh %440 : vector<2x32xf32>
    %442 = arith.truncf %441 : vector<2x32xf32> to vector<2x32xbf16>
    %cst_114 = arith.constant dense<0.000000e+00> : vector<2x128xf32>
    %443 = tpu.matmul %442, %434, %cst_114 {dimension_numbers = #tpu.dot_dimension_numbers<[1], [0], [0], [1], [0, 0, 1, 1], [], []>} : vector<2x32xbf16>, vector<32x128xbf16>, vector<2x128xf32> -> vector<2x128xf32>
    %444 = vector.broadcast %436 : vector<1x128xf32> to vector<2x128xf32>
    %445 = arith.addf %443, %444 : vector<2x128xf32>
    %c0_115 = arith.constant 0 : index
    %c0_116 = arith.constant 0 : index
    %446 = vector.load %arg6[%c0_115, %c0_116] : memref<2x128xf32, #tpu.memory_space<vmem>>, vector<2x128xf32>
    tpu.vector_store %arg6[%c0_115, %c0_116], %445 {strides = array<i32>} : memref<2x128xf32, #tpu.memory_space<vmem>>, vector<2x128xf32>,
    return
  }
}

</mosaic_0001>

<llo_original>
// kernel: tpu_custom_call.1
$region0: #{tpu_custom_call.1}
  #allocation0 [shape = 'u32[]', space=smem, size = 0x4, offset = 0x4, fixed_abs, tag = 'smem constant byte address 0x4 - core index']
  #allocation1 [shape = 'u32[72,128]{1,0:T(1,128)}', space=vmem, size = 0x9000, scoped, tag = 'internal scratch']
  %s0 = inlined_call_operand.hbm [shape: f32[16,32], index: 0, kind: input, shape index: {}]
  %s1 = inlined_call_operand.hbm [shape: f32[2,8], index: 1, kind: input, shape index: {}]
  %s2 = inlined_call_operand.hbm [shape: bf16[2,64,224], index: 2, kind: input, shape index: {}]
  %s3 = inlined_call_operand.hbm [shape: f32[2,8,96], index: 3, kind: input, shape index: {}]
  %s4 = inlined_call_operand.hbm [shape: bf16[32,160], index: 4, kind: input, shape index: {}]
  %s5 = inlined_call_operand.vmem [shape: f32[4,128], index: 5, kind: input, shape index: {}]
  %s6 = inlined_call_operand.hbm [shape: f32[2,128], index: 6, kind: output, shape index: {}]
  %s7 = sld [smem:[#allocation0]]
  $region54: #{tpu_custom_call.1} parent=0
    _
  %s9 = ssub.s32 1, %s7
  %s10 = scalar_select 0, %s9, %s7
  $region1: #{tpu_custom_call.1} parent=0
    #allocation2 [shape = 'u8[8192]{0}', space=vmem, size = 0x2000, scoped, tag = 'input window, operand 0, single buffered']
    #allocation3 [shape = 's32[1]{0}', space=sflag, size = 0x4, scoped, tag = 'scoped memory for tpu_custom_call.1']
    #allocation4 [shape = 's32[1]{0}', space=sflag, size = 0x4, scoped, tag = 'scoped memory for tpu_custom_call.1']
    #allocation5 [shape = 'u8[1024]{0}', space=vmem, size = 0x400, scoped, tag = 'input window, operand 1, single buffered']
    #allocation6 [shape = 's32[1]{0}', space=sflag, size = 0x4, scoped, tag = 'scoped memory for tpu_custom_call.1']
    #allocation7 [shape = 'u8[65536]{0}', space=vmem, size = 0x10000, scoped, tag = 'input window, operand 2, single buffered']
    #allocation8 [shape = 'u8[8192]{0}', space=vmem, size = 0x2000, scoped, tag = 'input window, operand 3, single buffered']
    #allocation9 [shape = 's32[1]{0}', space=sflag, size = 0x4, scoped, tag = 'scoped memory for tpu_custom_call.1']
    #allocation10 [shape = 'u8[16384]{0}', space=vmem, size = 0x4000, scoped, tag = 'input window, operand 4, single buffered']
    #allocation11 [shape = 'u8[1024]{0}', space=vmem, size = 0x400, scoped, tag = 'output window, operand 0, single buffered']
    %11 = vsyncpa [#allocation3], 0
    %12 = vsyncpa [#allocation6], 0
    %13 = vsyncpa [#allocation9], 0
    %14 = vsyncpa [#allocation4], 0
    // Predicated region
    $region2: #{tpu_custom_call.1} parent=1 // pred_check
      _
    $region3: #{tpu_custom_call.1} parent=1 // pred_check_branch
      %16 = sbr.rel (0) target = $region5
    $region4: #{tpu_custom_call.1} parent=1 // pred_region
      %18 = vsyncadd [#allocation3], 0
      %s19 = sshll.u32 %s0, 4
      %s20 = int_to_ptr.hbm [resolvable:$true] %s19
      %s21 = sshll.u32 [#allocation2], 4
      %s22 = int_to_ptr.vmem [resolvable:$true] %s21
      %27 = dma.hbm_to_vmem [thread:$0]  %s20, 256, %s22, [#allocation3], 128, 128, 8
    $region5: #{tpu_custom_call.1} parent=1 // pred_fallthru
      _
    // Predicated region
    $region6: #{tpu_custom_call.1} parent=1 // pred_check
      _
    $region7: #{tpu_custom_call.1} parent=1 // pred_check_branch
      %29 = sbr.rel (0) target = $region9
    $region8: #{tpu_custom_call.1} parent=1 // pred_region
      %31 = vsyncadd [#allocation6], 0
      %s33 = sshll.u32 %s1, 4
      %s34 = int_to_ptr.hbm [resolvable:$true] %s33
      %s35 = sshll.u32 [#allocation5], 4
      %s36 = int_to_ptr.vmem [resolvable:$true] %s35
      %38 = dma.hbm_to_vmem [thread:$0]  %s34, 32, %s36, [#allocation6]
    $region9: #{tpu_custom_call.1} parent=1 // pred_fallthru
      _
    // Predicated region
    $region10: #{tpu_custom_call.1} parent=1 // pred_check
      _
    $region11: #{tpu_custom_call.1} parent=1 // pred_check_branch
      %40 = sbr.rel (0) target = $region13
    $region12: #{tpu_custom_call.1} parent=1 // pred_region
      %42 = vsyncadd [#allocation6], 0
      %s43 = sshll.u32 %s2, 4
      %s44 = int_to_ptr.hbm [resolvable:$true] %s43
      %s45 = sshll.u32 [#allocation7], 4
      %s46 = int_to_ptr.vmem [resolvable:$true] %s45
      %51 = dma.hbm_to_vmem [thread:$0]  %s44, 2048, %s46, [#allocation6], 128, 128, 8
    $region13: #{tpu_custom_call.1} parent=1 // pred_fallthru
      _
    // Predicated region
    $region14: #{tpu_custom_call.1} parent=1 // pred_check
      _
    $region15: #{tpu_custom_call.1} parent=1 // pred_check_branch
      %53 = sbr.rel (0) target = $region17
    $region16: #{tpu_custom_call.1} parent=1 // pred_region
      %55 = vsyncadd [#allocation9], 0
      %s56 = sshll.u32 %s3, 4
      %s57 = int_to_ptr.hbm [resolvable:$true] %s56
      %s58 = sshll.u32 [#allocation8], 4
      %s59 = int_to_ptr.vmem [resolvable:$true] %s58
      %64 = dma.hbm_to_vmem [thread:$0]  %s57, 256, %s59, [#allocation9], 128, 128, 8
    $region17: #{tpu_custom_call.1} parent=1 // pred_fallthru
      _
    // Predicated region
    $region18: #{tpu_custom_call.1} parent=1 // pred_check
      _
    $region19: #{tpu_custom_call.1} parent=1 // pred_check_branch
      %66 = sbr.rel (0) target = $region21
    $region20: #{tpu_custom_call.1} parent=1 // pred_region
      %68 = vsyncadd [#allocation9], 0
      %s69 = sshll.u32 %s4, 4
      %s70 = int_to_ptr.hbm [resolvable:$true] %s69
      %s71 = sshll.u32 [#allocation10], 4
      %s72 = int_to_ptr.vmem [resolvable:$true] %s71
      %77 = dma.hbm_to_vmem [thread:$0]  %s70, 512, %s72, [#allocation9], 128, 128, 8
    $region21: #{tpu_custom_call.1} parent=1 // pred_fallthru
      _
    // Predicated region
    $region22: #{tpu_custom_call.1} parent=1 // pred_check
      _
    $region23: #{tpu_custom_call.1} parent=1 // pred_check_branch
      %79 = sbr.rel (0) target = $region25
    $region24: #{tpu_custom_call.1} parent=1 // pred_region
      _
    $region25: #{tpu_custom_call.1} parent=1 // pred_fallthru
      _
    // Predicated region
    $region26: #{tpu_custom_call.1} parent=1 // pred_check
      _
    $region27: #{tpu_custom_call.1} parent=1 // pred_check_branch
      %81 = sbr.rel (0) target = $region29
    $region28: #{tpu_custom_call.1} parent=1 // pred_region
      %83 = dma.done [#allocation3], 256
    $region29: #{tpu_custom_call.1} parent=1 // pred_fallthru
      _
    // Predicated region
    $region30: #{tpu_custom_call.1} parent=1 // pred_check
      _
    $region31: #{tpu_custom_call.1} parent=1 // pred_check_branch
      %85 = sbr.rel (0) target = $region33
    $region32: #{tpu_custom_call.1} parent=1 // pred_region
      %87 = dma.done [#allocation6], 32
    $region33: #{tpu_custom_call.1} parent=1 // pred_fallthru
      _
    // Predicated region
    $region34: #{tpu_custom_call.1} parent=1 // pred_check
      _
    $region35: #{tpu_custom_call.1} parent=1 // pred_check_branch
      %89 = sbr.rel (0) target = $region37
    $region36: #{tpu_custom_call.1} parent=1 // pred_region
      %91 = dma.done [#allocation6], 2048
    $region37: #{tpu_custom_call.1} parent=1 // pred_fallthru
      _
    // Predicated region
    $region38: #{tpu_custom_call.1} parent=1 // pred_check
      _
    $region39: #{tpu_custom_call.1} parent=1 // pred_check_branch
      %93 = sbr.rel (0) target = $region41
    $region40: #{tpu_custom_call.1} parent=1 // pred_region
      %95 = dma.done [#allocation9], 256
    $region41: #{tpu_custom_call.1} parent=1 // pred_fallthru
      _
    // Predicated region
    $region42: #{tpu_custom_call.1} parent=1 // pred_check
      _
    $region43: #{tpu_custom_call.1} parent=1 // pred_check_branch
      %97 = sbr.rel (0) target = $region45
    $region44: #{tpu_custom_call.1} parent=1 // pred_region
      %99 = dma.done [#allocation9], 512
    $region45: #{tpu_custom_call.1} parent=1 // pred_fallthru
      _
    %v101 = vld [vmem:[%s5] sm:$0x1]
    %v102 = vld [vmem:[%s5 + $0x1] sm:$0x1]
    %v103 = vld [vmem:[#allocation2] sm:$0xff]
    %v104 = vld [vmem:[#allocation2 + $0x8] sm:$0xff]
    %vm105 = vcmask 261120
    %v106 = vsel %vm105, %v103, 0.0
    %107 = vadd.xlane.f32.xlu0 %v106
    %v108 = vpop.xlane.xlu0 %107
    %v109 = vsel %vm105, %v104, 0.0
    %110 = vadd.xlane.f32.xlu0 %v109
    %v111 = vpop.xlane.xlu0 %110
    %v112 = vrcp.pop 32.0
    %v113 = vmul.f32 32.0, %v112
    %v114 = vsub.f32 1.0, %v113
    %v115 = vmul.f32 %v112, %v114
    %v116 = vadd.f32 %v112, %v115
    %vm117 = vweird.f32 %v112
    %v118 = vsel %vm117, %v112, %v116
    %v119 = vmul.f32 %v108, %v118
    %v120 = vmul.f32 %v111, %v118
    %v121 = vsub.f32 %v103, %v119
    %v122 = vsub.f32 %v104, %v120
    %v123 = vmul.f32 %v121, %v121
    %v124 = vmul.f32 %v122, %v122
    %v125 = vsel %vm105, %v123, 0.0
    %126 = vadd.xlane.f32.xlu0 %v125
    %v127 = vpop.xlane.xlu0 %126
    %v128 = vsel %vm105, %v124, 0.0
    %129 = vadd.xlane.f32.xlu0 %v128
    %v130 = vpop.xlane.xlu0 %129
    %v131 = vmul.f32 %v127, %v118
    %v132 = vmul.f32 %v130, %v118
    %v133 = vadd.f32 %v131, 1e-12
    %v134 = vadd.f32 %v132, 1e-12
    %v135 = vrsqrt.pop %v133
    %v136 = vmul.f32 %v135, %v133
    %v137 = vmul.f32 %v136, %v135
    %v138 = vmul.f32 0.5, %v137
    %v139 = vsub.f32 1.5, %v138
    %v140 = vmul.f32 %v135, %v139
    %vm141 = vweird.f32 %v133
    %vm142 = vweird.f32 %v135
    %vm143 = vmor %vm141, %vm142
    %v144 = vsel %vm143, %v135, %v140
    %v145 = vrsqrt.pop %v134
    %v146 = vmul.f32 %v145, %v134
    %v147 = vmul.f32 %v146, %v145
    %v148 = vmul.f32 0.5, %v147
    %v149 = vsub.f32 1.5, %v148
    %v150 = vmul.f32 %v145, %v149
    %vm151 = vweird.f32 %v134
    %vm152 = vweird.f32 %v145
    %vm153 = vmor %vm151, %vm152
    %v154 = vsel %vm153, %v145, %v150
    %v155 = vmul.f32 %v121, %v144
    %v156 = vmul.f32 %v122, %v154
    %v157 = vperm.slane %v101, 0
    %v158 = vmul.f32 %v155, %v157
    %v159 = vmul.f32 %v156, %v157
    %v160 = vperm.slane %v102, 0
    %v161 = vadd.f32 %v158, %v160
    %v162 = vadd.f32 %v159, %v160
    %v163 = vld [vmem:[#allocation5] sm:$0x3]
    %v164 = vld [vmem:[#allocation7] sm:$0xff]
    %v165 = vld [vmem:[#allocation7 + $0x8] sm:$0xff]
    %v166 = vld [vmem:[#allocation7 + $0x10] sm:$0xff]
    %v167 = vld [vmem:[#allocation7 + $0x18] sm:$0xff]
    %v168 = vld [vmem:[#allocation7 + $0x20] sm:$0xff]
    %v169 = vld [vmem:[#allocation7 + $0x28] sm:$0xff]
    %v170 = vld [vmem:[#allocation7 + $0x30] sm:$0xff]
    %v171 = vld [vmem:[#allocation7 + $0x38] sm:$0xff]
    %v172 = vld [vmem:[#allocation8] sm:$0xff]
    %v173 = vpack.c.bf16 %v162, %v161
    %v174 = vperm.slane %v172, 0
    %v179 = vunpack.c.l.b16 %v164
    %v180 = vunpack.c.l.b16 %v165
    %v181 = vunpack.c.l.b16 %v166
    %v182 = vunpack.c.l.b16 %v167
    %v183 = vpack.c.b16 %v180, %v179
    %v184 = vpack.c.b16 %v182, %v181
    %v188 = vsel %vm105, %v173, 0
    %190 = vmatpush.bf16.msra.mxu0 0
    %191 = vmatpush.bf16.msra.mxu0 0
    %192 = vmatpush.bf16.msra.mxu0 0
    %193 = vmatpush.bf16.msra.mxu0 0
    %194 = vmatpush.bf16.msra.mxu0 0
    %195 = vmatpush.bf16.msra.mxu0 0
    %196 = vmatpush.bf16.msra.mxu0 %v184
    %197 = vmatpush.bf16.msra.mxu0 %v183
    %198 = vmatmul.bf16.gmra.mxu0 %v188
    %v199 = vpop.f32.mrf.mxu0
    %v200 = vadd.f32 %v174, %v199
    %v201 = vpop.f32.mrf.mxu0
    %v202 = vadd.f32 %v174, %v201
    %203 = vdwg.mxu0
    %v204 = vpack.c.bf16 %v200, %v200
    %206 = vrot.lane.b32.xlu0 %v204, 96
    %v207 = vpop.permute.xlu0 %206
    %vm208 = vcmask 130048
    %v210 = vsel %vm208, %v204, 0
    %v213 = vsel %vm208, %v207, 0
    %215 = vmatpush.bf16.xpose.msra.mxu0 0
    %216 = vmatpush.bf16.xpose.msra.mxu0 0
    %217 = vmatpush.bf16.xpose.msra.mxu0 0
    %218 = vmatpush.bf16.xpose.msra.mxu0 0
    %219 = vmatpush.bf16.xpose.msra.mxu0 0
    %220 = vmatpush.bf16.xpose.msra.mxu0 0
    %221 = vmatpush.bf16.xpose.msra.mxu0 0
    %222 = vmatpush.bf16.xpose.msra.mxu0 %v213
    %223 = vmatmul.bf16.gmra.mxu0 %v210
    %v224 = vpop.f32.mrf.mxu0
    %v225 = vadd.f32 0.0, %v224
    %v226 = vpop.f32.mrf.mxu0
    %227 = vdwg.mxu0
    %v228 = vmul.f32 %v225, 0.25
    %v229 = vperm.slane %v163, 0
    %v230 = vadd.f32 %v228, %v229
    %vm231 = vcmask 64512
    %v232 = vsel %vm231, %v230, -inf
    %233 = vmax.xlane.f32.xlu0 %v232
    %v234 = vpop.xlane.xlu0 %233
    %v235 = vsub.f32 %v230, %v234
    %v236 = vmul.f32 %v235, 1.442695
    %v237 = vpow.pop %v236
    %v238 = vsel %vm231, %v237, 0.0
    %239 = vadd.xlane.f32.xlu0 %v238
    %v240 = vpop.xlane.xlu0 %239
    %v241 = vrcp.pop %v240
    %v242 = vmul.f32 %v237, %v241
    %v243 = vpack.c.bf16 %v242, %v242
    %244 = vrot.lane.b32.xlu0 %v204, 64
    %v245 = vpop.permute.xlu0 %244
    %v247 = vsel %vm231, %v243, 0
    %vm249 = vcmask 1043456
    %v251 = vsel %vm249, %v245, 0
    %253 = vmatpush.bf16.msra.mxu0 0
    %254 = vmatpush.bf16.msra.mxu0 0
    %255 = vmatpush.bf16.msra.mxu0 0
    %256 = vmatpush.bf16.msra.mxu0 0
    %257 = vmatpush.bf16.msra.mxu0 0
    %258 = vmatpush.bf16.msra.mxu0 0
    %259 = vmatpush.bf16.msra.mxu0 0
    %260 = vmatpush.bf16.msra.mxu0 %v251
    %261 = vmatmul.bf16.gmra.mxu0 %v247
    %v262 = vpop.f32.mrf.mxu0
    %v263 = vadd.f32 0.0, %v262
    %v264 = vpop.f32.mrf.mxu0
    %265 = vdwg.mxu0
    %v266 = vpack.c.bf16 %v263, %v263
    %267 = vrot.lane.b32.xlu0 %v204, 112
    %v268 = vpop.permute.xlu0 %267
    %269 = vrot.lane.b32.xlu0 %v204, 80
    %v270 = vpop.permute.xlu0 %269
    %v272 = vsel %vm208, %v268, 0
    %v275 = vsel %vm208, %v270, 0
    %277 = vmatpush.bf16.xpose.msra.mxu0 0
    %278 = vmatpush.bf16.xpose.msra.mxu0 0
    %279 = vmatpush.bf16.xpose.msra.mxu0 0
    %280 = vmatpush.bf16.xpose.msra.mxu0 0
    %281 = vmatpush.bf16.xpose.msra.mxu0 0
    %282 = vmatpush.bf16.xpose.msra.mxu0 0
    %283 = vmatpush.bf16.xpose.msra.mxu0 0
    %284 = vmatpush.bf16.xpose.msra.mxu0 %v275
    %285 = vmatmul.bf16.gmra.mxu0 %v272
    %v286 = vpop.f32.mrf.mxu0
    %v287 = vadd.f32 0.0, %v286
    %v288 = vpop.f32.mrf.mxu0
    %289 = vdwg.mxu0
    %v290 = vmul.f32 %v287, 0.25
    %v291 = vadd.f32 %v290, %v229
    %v292 = vsel %vm231, %v291, -inf
    %293 = vmax.xlane.f32.xlu0 %v292
    %v294 = vpop.xlane.xlu0 %293
    %v295 = vsub.f32 %v291, %v294
    %v296 = vmul.f32 %v295, 1.442695
    %v297 = vpow.pop %v296
    %v298 = vsel %vm231, %v297, 0.0
    %299 = vadd.xlane.f32.xlu0 %v298
    %v300 = vpop.xlane.xlu0 %299
    %v301 = vrcp.pop %v300
    %v302 = vmul.f32 %v297, %v301
    %v303 = vpack.c.bf16 %v302, %v302
    %304 = vrot.lane.b32.xlu0 %v204, 48
    %v305 = vpop.permute.xlu0 %304
    %v307 = vsel %vm231, %v303, 0
    %v310 = vsel %vm249, %v305, 0
    %312 = vmatpush.bf16.msra.mxu0 0
    %313 = vmatpush.bf16.msra.mxu0 0
    %314 = vmatpush.bf16.msra.mxu0 0
    %315 = vmatpush.bf16.msra.mxu0 0
    %316 = vmatpush.bf16.msra.mxu0 0
    %317 = vmatpush.bf16.msra.mxu0 0
    %318 = vmatpush.bf16.msra.mxu0 0
    %319 = vmatpush.bf16.msra.mxu0 %v310
    %320 = vmatmul.bf16.gmra.mxu0 %v307
    %v321 = vpop.f32.mrf.mxu0
    %v322 = vadd.f32 0.0, %v321
    %v323 = vpop.f32.mrf.mxu0
    %324 = vdwg.mxu0
    %v325 = vpack.c.bf16 %v322, %v322
    %326 = vrot.lane.b32.xlu0 %v184, 32
    %v327 = vpop.permute.xlu0 %326
    %v330 = vsel %vm208, %v325, 0
    %332 = vmatpush.bf16.msra.mxu0 0
    %333 = vmatpush.bf16.msra.mxu0 0
    %334 = vmatpush.bf16.msra.mxu0 0
    %335 = vmatpush.bf16.msra.mxu0 0
    %336 = vmatpush.bf16.msra.mxu0 0
    %337 = vmatpush.bf16.msra.mxu0 0
    %338 = vmatpush.bf16.msra.mxu0 0
    %339 = vmatpush.bf16.msra.mxu0 %v327
    %340 = vmatmul.bf16.gmra.mxu0 %v330
    %v341 = vpop.f32.mrf.mxu0
    %v342 = vadd.f32 0.0, %v341
    %v343 = vpop.f32.mrf.mxu0
    %344 = vdwg.mxu0
    %345 = vrot.lane.b32.xlu0 %v183, 32
    %v346 = vpop.permute.xlu0 %345
    %v349 = vsel %vm208, %v266, 0
    %351 = vmatpush.bf16.msra.mxu0 0
    %352 = vmatpush.bf16.msra.mxu0 0
    %353 = vmatpush.bf16.msra.mxu0 0
    %354 = vmatpush.bf16.msra.mxu0 0
    %355 = vmatpush.bf16.msra.mxu0 0
    %356 = vmatpush.bf16.msra.mxu0 0
    %357 = vmatpush.bf16.msra.mxu0 0
    %358 = vmatpush.bf16.msra.mxu0 %v346
    %359 = vmatmul.bf16.gmra.mxu0 %v349
    %v360 = vpop.f32.mrf.mxu0
    %v361 = vadd.f32 %v342, %v360
    %v362 = vpop.f32.mrf.mxu0
    %363 = vdwg.mxu0
    %v364 = vpack.c.bf16 %v202, %v202
    %366 = vrot.lane.b32.xlu0 %v364, 96
    %v367 = vpop.permute.xlu0 %366
    %v369 = vsel %vm208, %v364, 0
    %v372 = vsel %vm208, %v367, 0
    %374 = vmatpush.bf16.xpose.msra.mxu0 0
    %375 = vmatpush.bf16.xpose.msra.mxu0 0
    %376 = vmatpush.bf16.xpose.msra.mxu0 0
    %377 = vmatpush.bf16.xpose.msra.mxu0 0
    %378 = vmatpush.bf16.xpose.msra.mxu0 0
    %379 = vmatpush.bf16.xpose.msra.mxu0 0
    %380 = vmatpush.bf16.xpose.msra.mxu0 0
    %381 = vmatpush.bf16.xpose.msra.mxu0 %v372
    %382 = vmatmul.bf16.gmra.mxu0 %v369
    %v383 = vpop.f32.mrf.mxu0
    %v384 = vadd.f32 0.0, %v383
    %v385 = vpop.f32.mrf.mxu0
    %386 = vdwg.mxu0
    %v387 = vmul.f32 %v384, 0.25
    %v388 = vperm.slane %v163, 1
    %v389 = vadd.f32 %v387, %v388
    %v390 = vsel %vm231, %v389, -inf
    %391 = vmax.xlane.f32.xlu0 %v390
    %v392 = vpop.xlane.xlu0 %391
    %v393 = vsub.f32 %v389, %v392
    %v394 = vmul.f32 %v393, 1.442695
    %v395 = vpow.pop %v394
    %v396 = vsel %vm231, %v395, 0.0
    %397 = vadd.xlane.f32.xlu0 %v396
    %v398 = vpop.xlane.xlu0 %397
    %v399 = vrcp.pop %v398
    %v400 = vmul.f32 %v395, %v399
    %v401 = vpack.c.bf16 %v400, %v400
    %402 = vrot.lane.b32.xlu0 %v364, 64
    %v403 = vpop.permute.xlu0 %402
    %v405 = vsel %vm231, %v401, 0
    %v408 = vsel %vm249, %v403, 0
    %410 = vmatpush.bf16.msra.mxu0 0
    %411 = vmatpush.bf16.msra.mxu0 0
    %412 = vmatpush.bf16.msra.mxu0 0
    %413 = vmatpush.bf16.msra.mxu0 0
    %414 = vmatpush.bf16.msra.mxu0 0
    %415 = vmatpush.bf16.msra.mxu0 0
    %416 = vmatpush.bf16.msra.mxu0 0
    %417 = vmatpush.bf16.msra.mxu0 %v408
    %418 = vmatmul.bf16.gmra.mxu0 %v405
    %v419 = vpop.f32.mrf.mxu0
    %v420 = vadd.f32 0.0, %v419
    %v421 = vpop.f32.mrf.mxu0
    %422 = vdwg.mxu0
    %v423 = vpack.c.bf16 %v420, %v420
    %424 = vrot.lane.b32.xlu0 %v364, 112
    %v425 = vpop.permute.xlu0 %424
    %426 = vrot.lane.b32.xlu0 %v364, 80
    %v427 = vpop.permute.xlu0 %426
    %v429 = vsel %vm208, %v425, 0
    %v432 = vsel %vm208, %v427, 0
    %434 = vmatpush.bf16.xpose.msra.mxu0 0
    %435 = vmatpush.bf16.xpose.msra.mxu0 0
    %436 = vmatpush.bf16.xpose.msra.mxu0 0
    %437 = vmatpush.bf16.xpose.msra.mxu0 0
    %438 = vmatpush.bf16.xpose.msra.mxu0 0
    %439 = vmatpush.bf16.xpose.msra.mxu0 0
    %440 = vmatpush.bf16.xpose.msra.mxu0 0
    %441 = vmatpush.bf16.xpose.msra.mxu0 %v432
    %442 = vmatmul.bf16.gmra.mxu0 %v429
    %v443 = vpop.f32.mrf.mxu0
    %v444 = vadd.f32 0.0, %v443
    %v445 = vpop.f32.mrf.mxu0
    %446 = vdwg.mxu0
    %v447 = vmul.f32 %v444, 0.25
    %v448 = vadd.f32 %v447, %v388
    %v449 = vsel %vm231, %v448, -inf
    %450 = vmax.xlane.f32.xlu0 %v449
    %v451 = vpop.xlane.xlu0 %450
    %v452 = vsub.f32 %v448, %v451
    %v453 = vmul.f32 %v452, 1.442695
    %v454 = vpow.pop %v453
    %v455 = vsel %vm231, %v454, 0.0
    %456 = vadd.xlane.f32.xlu0 %v455
    %v457 = vpop.xlane.xlu0 %456
    %v458 = vrcp.pop %v457
    %v459 = vmul.f32 %v454, %v458
    %v460 = vpack.c.bf16 %v459, %v459
    %461 = vrot.lane.b32.xlu0 %v364, 48
    %v462 = vpop.permute.xlu0 %461
    %v464 = vsel %vm231, %v460, 0
    %v467 = vsel %vm249, %v462, 0
    %469 = vmatpush.bf16.msra.mxu0 0
    %470 = vmatpush.bf16.msra.mxu0 0
    %471 = vmatpush.bf16.msra.mxu0 0
    %472 = vmatpush.bf16.msra.mxu0 0
    %473 = vmatpush.bf16.msra.mxu0 0
    %474 = vmatpush.bf16.msra.mxu0 0
    %475 = vmatpush.bf16.msra.mxu0 0
    %476 = vmatpush.bf16.msra.mxu0 %v467
    %477 = vmatmul.bf16.gmra.mxu0 %v464
    %v478 = vpop.f32.mrf.mxu0
    %v479 = vadd.f32 0.0, %v478
    %v480 = vpop.f32.mrf.mxu0
    %481 = vdwg.mxu0
    %v482 = vpack.c.bf16 %v479, %v479
    %v484 = vsel %vm208, %v482, 0
    %486 = vmatpush.bf16.msra.mxu0 0
    %487 = vmatpush.bf16.msra.mxu0 0
    %488 = vmatpush.bf16.msra.mxu0 0
    %489 = vmatpush.bf16.msra.mxu0 0
    %490 = vmatpush.bf16.msra.mxu0 0
    %491 = vmatpush.bf16.msra.mxu0 0
    %492 = vmatpush.bf16.msra.mxu0 0
    %493 = vmatpush.bf16.msra.mxu0 %v327
    %494 = vmatmul.bf16.gmra.mxu0 %v484
    %v495 = vpop.f32.mrf.mxu0
    %v496 = vadd.f32 0.0, %v495
    %v497 = vpop.f32.mrf.mxu0
    %498 = vdwg.mxu0
    %v500 = vsel %vm208, %v423, 0
    %502 = vmatpush.bf16.msra.mxu0 0
    %503 = vmatpush.bf16.msra.mxu0 0
    %504 = vmatpush.bf16.msra.mxu0 0
    %505 = vmatpush.bf16.msra.mxu0 0
    %506 = vmatpush.bf16.msra.mxu0 0
    %507 = vmatpush.bf16.msra.mxu0 0
    %508 = vmatpush.bf16.msra.mxu0 0
    %509 = vmatpush.bf16.msra.mxu0 %v346
    %510 = vmatmul.bf16.gmra.mxu0 %v500
    %v511 = vpop.f32.mrf.mxu0
    %v512 = vadd.f32 %v496, %v511
    %v513 = vpop.f32.mrf.mxu0
    %514 = vdwg.mxu0
    %v515 = vperm.slane %v172, 1
    %v516 = vadd.f32 %v361, %v515
    %v517 = vadd.f32 %v512, %v515
    %v518 = vadd.f32 %v161, %v516
    %v519 = vadd.f32 %v162, %v517
    %v520 = vsel %vm105, %v518, 0.0
    %521 = vadd.xlane.f32.xlu0 %v520
    %v522 = vpop.xlane.xlu0 %521
    %v523 = vsel %vm105, %v519, 0.0
    %524 = vadd.xlane.f32.xlu0 %v523
    %v525 = vpop.xlane.xlu0 %524
    %v526 = vmul.f32 %v522, %v118
    %v527 = vmul.f32 %v525, %v118
    %v528 = vsub.f32 %v518, %v526
    %v529 = vsub.f32 %v519, %v527
    %v530 = vmul.f32 %v528, %v528
    %v531 = vmul.f32 %v529, %v529
    %v532 = vsel %vm105, %v530, 0.0
    %533 = vadd.xlane.f32.xlu0 %v532
    %v534 = vpop.xlane.xlu0 %533
    %v535 = vsel %vm105, %v531, 0.0
    %536 = vadd.xlane.f32.xlu0 %v535
    %v537 = vpop.xlane.xlu0 %536
    %v538 = vmul.f32 %v534, %v118
    %v539 = vmul.f32 %v537, %v118
    %v540 = vadd.f32 %v538, 1e-12
    %v541 = vadd.f32 %v539, 1e-12
    %v542 = vrsqrt.pop %v540
    %v543 = vmul.f32 %v542, %v540
    %v544 = vmul.f32 %v543, %v542
    %v545 = vmul.f32 0.5, %v544
    %v546 = vsub.f32 1.5, %v545
    %v547 = vmul.f32 %v542, %v546
    %vm548 = vweird.f32 %v540
    %vm549 = vweird.f32 %v542
    %vm550 = vmor %vm548, %vm549
    %v551 = vsel %vm550, %v542, %v547
    %v552 = vrsqrt.pop %v541
    %v553 = vmul.f32 %v552, %v541
    %v554 = vmul.f32 %v553, %v552
    %v555 = vmul.f32 0.5, %v554
    %v556 = vsub.f32 1.5, %v555
    %v557 = vmul.f32 %v552, %v556
    %vm558 = vweird.f32 %v541
    %vm559 = vweird.f32 %v552
    %vm560 = vmor %vm558, %vm559
    %v561 = vsel %vm560, %v552, %v557
    %v562 = vmul.f32 %v528, %v551
    %v563 = vmul.f32 %v529, %v561
    %v564 = vperm.slane %v172, 4
    %v565 = vmul.f32 %v562, %v564
    %v566 = vmul.f32 %v563, %v564
    %v567 = vperm.slane %v172, 5
    %v568 = vadd.f32 %v565, %v567
    %v569 = vadd.f32 %v566, %v567
    %v570 = vpack.c.bf16 %v569, %v568
    %v571 = vperm.slane %v172, 2
    %v572 = vunpack.c.h.b16 %v164
    %v573 = vunpack.c.h.b16 %v165
    %v574 = vunpack.c.h.b16 %v166
    %v575 = vunpack.c.h.b16 %v167
    %v576 = vpack.c.b16 %v573, %v572
    %v577 = vpack.c.b16 %v575, %v574
    %v581 = vsel %vm105, %v570, 0
    %583 = vmatpush.bf16.msra.mxu0 0
    %584 = vmatpush.bf16.msra.mxu0 0
    %585 = vmatpush.bf16.msra.mxu0 0
    %586 = vmatpush.bf16.msra.mxu0 0
    %587 = vmatpush.bf16.msra.mxu0 0
    %588 = vmatpush.bf16.msra.mxu0 0
    %589 = vmatpush.bf16.msra.mxu0 %v577
    %590 = vmatpush.bf16.msra.mxu0 %v576
    %591 = vmatmul.bf16.gmra.mxu0 %v581
    %v592 = vpop.f32.mrf.mxu0
    %v593 = vadd.f32 %v571, %v592
    %v594 = vpop.f32.mrf.mxu0
    %v595 = vadd.f32 %v571, %v594
    %596 = vdwg.mxu0
    %v597 = vmul.f32 %v593, %v593
    %v598 = vmul.f32 %v595, %v595
    %v599 = vmul.f32 %v593, %v597
    %v600 = vmul.f32 %v595, %v598
    %v601 = vmul.f32 %v599, 0.044715
    %v602 = vmul.f32 %v600, 0.044715
    %v603 = vadd.f32 %v593, %v601
    %v604 = vadd.f32 %v595, %v602
    %v605 = vmul.f32 %v603, 0.7978846
    %v606 = vmul.f32 %v604, 0.7978846
    %v607 = vtanh.pop %v605
    %v608 = vtanh.pop %v606
    %v609 = vadd.f32 %v607, 1.0
    %v610 = vadd.f32 %v608, 1.0
    %v611 = vmul.f32 %v609, 0.5
    %v612 = vmul.f32 %v610, 0.5
    %v613 = vmul.f32 %v593, %v611
    %v614 = vmul.f32 %v595, %v612
    %v615 = vpack.c.bf16 %v614, %v613
    %v616 = vperm.slane %v172, 3
    %v621 = vunpack.c.h.b16 %v168
    %v622 = vunpack.c.h.b16 %v169
    %v623 = vunpack.c.h.b16 %v170
    %v624 = vunpack.c.h.b16 %v171
    %v625 = vpack.c.b16 %v622, %v621
    %v626 = vpack.c.b16 %v624, %v623
    %627 = vrot.lane.b32.xlu0 %v576, 64
    %v628 = vpop.permute.xlu0 %627
    %629 = vrot.lane.b32.xlu0 %v577, 64
    %v630 = vpop.permute.xlu0 %629
    %631 = vrot.lane.b32.xlu0 %v625, 64
    %v632 = vpop.permute.xlu0 %631
    %633 = vrot.lane.b32.xlu0 %v626, 64
    %v634 = vpop.permute.xlu0 %633
    %vm639 = vcmask 523264
    %v641 = vsel %vm639, %v615, 0
    %643 = vmatpush.bf16.msra.mxu0 0
    %644 = vmatpush.bf16.msra.mxu0 0
    %645 = vmatpush.bf16.msra.mxu0 0
    %646 = vmatpush.bf16.msra.mxu0 0
    %647 = vmatpush.bf16.msra.mxu0 %v634
    %648 = vmatpush.bf16.msra.mxu0 %v632
    %649 = vmatpush.bf16.msra.mxu0 %v630
    %650 = vmatpush.bf16.msra.mxu0 %v628
    %651 = vmatmul.bf16.gmra.mxu0 %v641
    %v652 = vpop.f32.mrf.mxu0
    %v653 = vadd.f32 %v616, %v652
    %v654 = vpop.f32.mrf.mxu0
    %v655 = vadd.f32 %v616, %v654
    %656 = vdwg.mxu0
    %v657 = vadd.f32 %v568, %v653
    %v658 = vadd.f32 %v569, %v655
    %v659 = vsel %vm105, %v657, 0.0
    %660 = vadd.xlane.f32.xlu0 %v659
    %v661 = vpop.xlane.xlu0 %660
    %v662 = vsel %vm105, %v658, 0.0
    %663 = vadd.xlane.f32.xlu0 %v662
    %v664 = vpop.xlane.xlu0 %663
    %v665 = vmul.f32 %v661, %v118
    %v666 = vmul.f32 %v664, %v118
    %v667 = vsub.f32 %v657, %v665
    %v668 = vsub.f32 %v658, %v666
    %v669 = vmul.f32 %v667, %v667
    %v670 = vmul.f32 %v668, %v668
    %v671 = vsel %vm105, %v669, 0.0
    %672 = vadd.xlane.f32.xlu0 %v671
    %v673 = vpop.xlane.xlu0 %672
    %v674 = vsel %vm105, %v670, 0.0
    %675 = vadd.xlane.f32.xlu0 %v674
    %v676 = vpop.xlane.xlu0 %675
    %v677 = vmul.f32 %v673, %v118
    %v678 = vmul.f32 %v676, %v118
    %v679 = vadd.f32 %v677, 1e-12
    %v680 = vadd.f32 %v678, 1e-12
    %v681 = vrsqrt.pop %v679
    %v682 = vmul.f32 %v681, %v679
    %v683 = vmul.f32 %v682, %v681
    %v684 = vmul.f32 0.5, %v683
    %v685 = vsub.f32 1.5, %v684
    %v686 = vmul.f32 %v681, %v685
    %vm687 = vweird.f32 %v679
    %vm688 = vweird.f32 %v681
    %vm689 = vmor %vm687, %vm688
    %v690 = vsel %vm689, %v681, %v686
    %v691 = vrsqrt.pop %v680
    %v692 = vmul.f32 %v691, %v680
    %v693 = vmul.f32 %v692, %v691
    %v694 = vmul.f32 0.5, %v693
    %v695 = vsub.f32 1.5, %v694
    %v696 = vmul.f32 %v691, %v695
    %vm697 = vweird.f32 %v680
    %vm698 = vweird.f32 %v691
    %vm699 = vmor %vm697, %vm698
    %v700 = vsel %vm699, %v691, %v696
    %v701 = vmul.f32 %v667, %v690
    %v702 = vmul.f32 %v668, %v700
    %v703 = vperm.slane %v172, 6
    %v704 = vmul.f32 %v701, %v703
    %v705 = vmul.f32 %v702, %v703
    %v706 = vperm.slane %v172, 7
    %v707 = vadd.f32 %v704, %v706
    %v708 = vadd.f32 %v705, %v706
    %s709 = scalar_lea.vmem [#allocation7], 64
    %v710 = vld [vmem:[%s709] sm:$0xff]
    %v711 = vld [vmem:[%s709 + $0x8] sm:$0xff]
    %v712 = vld [vmem:[%s709 + $0x10] sm:$0xff]
    %v713 = vld [vmem:[%s709 + $0x18] sm:$0xff]
    %v714 = vld [vmem:[%s709 + $0x20] sm:$0xff]
    %v715 = vld [vmem:[%s709 + $0x28] sm:$0xff]
    %v716 = vld [vmem:[%s709 + $0x30] sm:$0xff]
    %v717 = vld [vmem:[%s709 + $0x38] sm:$0xff]
    %s718 = scalar_lea.vmem [#allocation8], 8
    %v719 = vld [vmem:[%s718] sm:$0xff]
    %v720 = vpack.c.bf16 %v708, %v707
    %v721 = vperm.slane %v719, 0
    %v726 = vunpack.c.l.b16 %v710
    %v727 = vunpack.c.l.b16 %v711
    %v728 = vunpack.c.l.b16 %v712
    %v729 = vunpack.c.l.b16 %v713
    %v730 = vpack.c.b16 %v727, %v726
    %v731 = vpack.c.b16 %v729, %v728
    %v735 = vsel %vm105, %v720, 0
    %737 = vmatpush.bf16.msra.mxu0 0
    %738 = vmatpush.bf16.msra.mxu0 0
    %739 = vmatpush.bf16.msra.mxu0 0
    %740 = vmatpush.bf16.msra.mxu0 0
    %741 = vmatpush.bf16.msra.mxu0 0
    %742 = vmatpush.bf16.msra.mxu0 0
    %743 = vmatpush.bf16.msra.mxu0 %v731
    %744 = vmatpush.bf16.msra.mxu0 %v730
    %745 = vmatmul.bf16.gmra.mxu0 %v735
    %v746 = vpop.f32.mrf.mxu0
    %v747 = vadd.f32 %v721, %v746
    %v748 = vpop.f32.mrf.mxu0
    %v749 = vadd.f32 %v721, %v748
    %750 = vdwg.mxu0
    %v751 = vpack.c.bf16 %v747, %v747
    %753 = vrot.lane.b32.xlu0 %v751, 96
    %v754 = vpop.permute.xlu0 %753
    %v756 = vsel %vm208, %v751, 0
    %v759 = vsel %vm208, %v754, 0
    %761 = vmatpush.bf16.xpose.msra.mxu0 0
    %762 = vmatpush.bf16.xpose.msra.mxu0 0
    %763 = vmatpush.bf16.xpose.msra.mxu0 0
    %764 = vmatpush.bf16.xpose.msra.mxu0 0
    %765 = vmatpush.bf16.xpose.msra.mxu0 0
    %766 = vmatpush.bf16.xpose.msra.mxu0 0
    %767 = vmatpush.bf16.xpose.msra.mxu0 0
    %768 = vmatpush.bf16.xpose.msra.mxu0 %v759
    %769 = vmatmul.bf16.gmra.mxu0 %v756
    %v770 = vpop.f32.mrf.mxu0
    %v771 = vadd.f32 0.0, %v770
    %v772 = vpop.f32.mrf.mxu0
    %773 = vdwg.mxu0
    %v774 = vmul.f32 %v771, 0.25
    %v775 = vadd.f32 %v774, %v229
    %v776 = vsel %vm231, %v775, -inf
    %777 = vmax.xlane.f32.xlu0 %v776
    %v778 = vpop.xlane.xlu0 %777
    %v779 = vsub.f32 %v775, %v778
    %v780 = vmul.f32 %v779, 1.442695
    %v781 = vpow.pop %v780
    %v782 = vsel %vm231, %v781, 0.0
    %783 = vadd.xlane.f32.xlu0 %v782
    %v784 = vpop.xlane.xlu0 %783
    %v785 = vrcp.pop %v784
    %v786 = vmul.f32 %v781, %v785
    %v787 = vpack.c.bf16 %v786, %v786
    %788 = vrot.lane.b32.xlu0 %v751, 64
    %v789 = vpop.permute.xlu0 %788
    %v791 = vsel %vm231, %v787, 0
    %v794 = vsel %vm249, %v789, 0
    %796 = vmatpush.bf16.msra.mxu0 0
    %797 = vmatpush.bf16.msra.mxu0 0
    %798 = vmatpush.bf16.msra.mxu0 0
    %799 = vmatpush.bf16.msra.mxu0 0
    %800 = vmatpush.bf16.msra.mxu0 0
    %801 = vmatpush.bf16.msra.mxu0 0
    %802 = vmatpush.bf16.msra.mxu0 0
    %803 = vmatpush.bf16.msra.mxu0 %v794
    %804 = vmatmul.bf16.gmra.mxu0 %v791
    %v805 = vpop.f32.mrf.mxu0
    %v806 = vadd.f32 0.0, %v805
    %v807 = vpop.f32.mrf.mxu0
    %808 = vdwg.mxu0
    %v809 = vpack.c.bf16 %v806, %v806
    %810 = vrot.lane.b32.xlu0 %v751, 112
    %v811 = vpop.permute.xlu0 %810
    %812 = vrot.lane.b32.xlu0 %v751, 80
    %v813 = vpop.permute.xlu0 %812
    %v815 = vsel %vm208, %v811, 0
    %v818 = vsel %vm208, %v813, 0
    %820 = vmatpush.bf16.xpose.msra.mxu0 0
    %821 = vmatpush.bf16.xpose.msra.mxu0 0
    %822 = vmatpush.bf16.xpose.msra.mxu0 0
    %823 = vmatpush.bf16.xpose.msra.mxu0 0
    %824 = vmatpush.bf16.xpose.msra.mxu0 0
    %825 = vmatpush.bf16.xpose.msra.mxu0 0
    %826 = vmatpush.bf16.xpose.msra.mxu0 0
    %827 = vmatpush.bf16.xpose.msra.mxu0 %v818
    %828 = vmatmul.bf16.gmra.mxu0 %v815
    %v829 = vpop.f32.mrf.mxu0
    %v830 = vadd.f32 0.0, %v829
    %v831 = vpop.f32.mrf.mxu0
    %832 = vdwg.mxu0
    %v833 = vmul.f32 %v830, 0.25
    %v834 = vadd.f32 %v833, %v229
    %v835 = vsel %vm231, %v834, -inf
    %836 = vmax.xlane.f32.xlu0 %v835
    %v837 = vpop.xlane.xlu0 %836
    %v838 = vsub.f32 %v834, %v837
    %v839 = vmul.f32 %v838, 1.442695
    %v840 = vpow.pop %v839
    %v841 = vsel %vm231, %v840, 0.0
    %842 = vadd.xlane.f32.xlu0 %v841
    %v843 = vpop.xlane.xlu0 %842
    %v844 = vrcp.pop %v843
    %v845 = vmul.f32 %v840, %v844
    %v846 = vpack.c.bf16 %v845, %v845
    %847 = vrot.lane.b32.xlu0 %v751, 48
    %v848 = vpop.permute.xlu0 %847
    %v850 = vsel %vm231, %v846, 0
    %v853 = vsel %vm249, %v848, 0
    %855 = vmatpush.bf16.msra.mxu0 0
    %856 = vmatpush.bf16.msra.mxu0 0
    %857 = vmatpush.bf16.msra.mxu0 0
    %858 = vmatpush.bf16.msra.mxu0 0
    %859 = vmatpush.bf16.msra.mxu0 0
    %860 = vmatpush.bf16.msra.mxu0 0
    %861 = vmatpush.bf16.msra.mxu0 0
    %862 = vmatpush.bf16.msra.mxu0 %v853
    %863 = vmatmul.bf16.gmra.mxu0 %v850
    %v864 = vpop.f32.mrf.mxu0
    %v865 = vadd.f32 0.0, %v864
    %v866 = vpop.f32.mrf.mxu0
    %867 = vdwg.mxu0
    %v868 = vpack.c.bf16 %v865, %v865
    %869 = vrot.lane.b32.xlu0 %v731, 32
    %v870 = vpop.permute.xlu0 %869
    %v873 = vsel %vm208, %v868, 0
    %875 = vmatpush.bf16.msra.mxu0 0
    %876 = vmatpush.bf16.msra.mxu0 0
    %877 = vmatpush.bf16.msra.mxu0 0
    %878 = vmatpush.bf16.msra.mxu0 0
    %879 = vmatpush.bf16.msra.mxu0 0
    %880 = vmatpush.bf16.msra.mxu0 0
    %881 = vmatpush.bf16.msra.mxu0 0
    %882 = vmatpush.bf16.msra.mxu0 %v870
    %883 = vmatmul.bf16.gmra.mxu0 %v873
    %v884 = vpop.f32.mrf.mxu0
    %v885 = vadd.f32 0.0, %v884
    %v886 = vpop.f32.mrf.mxu0
    %887 = vdwg.mxu0
    %888 = vrot.lane.b32.xlu0 %v730, 32
    %v889 = vpop.permute.xlu0 %888
    %v892 = vsel %vm208, %v809, 0
    %894 = vmatpush.bf16.msra.mxu0 0
    %895 = vmatpush.bf16.msra.mxu0 0
    %896 = vmatpush.bf16.msra.mxu0 0
    %897 = vmatpush.bf16.msra.mxu0 0
    %898 = vmatpush.bf16.msra.mxu0 0
    %899 = vmatpush.bf16.msra.mxu0 0
    %900 = vmatpush.bf16.msra.mxu0 0
    %901 = vmatpush.bf16.msra.mxu0 %v889
    %902 = vmatmul.bf16.gmra.mxu0 %v892
    %v903 = vpop.f32.mrf.mxu0
    %v904 = vadd.f32 %v885, %v903
    %v905 = vpop.f32.mrf.mxu0
    %906 = vdwg.mxu0
    %v907 = vpack.c.bf16 %v749, %v749
    %909 = vrot.lane.b32.xlu0 %v907, 96
    %v910 = vpop.permute.xlu0 %909
    %v912 = vsel %vm208, %v907, 0
    %v915 = vsel %vm208, %v910, 0
    %917 = vmatpush.bf16.xpose.msra.mxu0 0
    %918 = vmatpush.bf16.xpose.msra.mxu0 0
    %919 = vmatpush.bf16.xpose.msra.mxu0 0
    %920 = vmatpush.bf16.xpose.msra.mxu0 0
    %921 = vmatpush.bf16.xpose.msra.mxu0 0
    %922 = vmatpush.bf16.xpose.msra.mxu0 0
    %923 = vmatpush.bf16.xpose.msra.mxu0 0
    %924 = vmatpush.bf16.xpose.msra.mxu0 %v915
    %925 = vmatmul.bf16.gmra.mxu0 %v912
    %v926 = vpop.f32.mrf.mxu0
    %v927 = vadd.f32 0.0, %v926
    %v928 = vpop.f32.mrf.mxu0
    %929 = vdwg.mxu0
    %v930 = vmul.f32 %v927, 0.25
    %v931 = vadd.f32 %v930, %v388
    %v932 = vsel %vm231, %v931, -inf
    %933 = vmax.xlane.f32.xlu0 %v932
    %v934 = vpop.xlane.xlu0 %933
    %v935 = vsub.f32 %v931, %v934
    %v936 = vmul.f32 %v935, 1.442695
    %v937 = vpow.pop %v936
    %v938 = vsel %vm231, %v937, 0.0
    %939 = vadd.xlane.f32.xlu0 %v938
    %v940 = vpop.xlane.xlu0 %939
    %v941 = vrcp.pop %v940
    %v942 = vmul.f32 %v937, %v941
    %v943 = vpack.c.bf16 %v942, %v942
    %944 = vrot.lane.b32.xlu0 %v907, 64
    %v945 = vpop.permute.xlu0 %944
    %v947 = vsel %vm231, %v943, 0
    %v950 = vsel %vm249, %v945, 0
    %952 = vmatpush.bf16.msra.mxu0 0
    %953 = vmatpush.bf16.msra.mxu0 0
    %954 = vmatpush.bf16.msra.mxu0 0
    %955 = vmatpush.bf16.msra.mxu0 0
    %956 = vmatpush.bf16.msra.mxu0 0
    %957 = vmatpush.bf16.msra.mxu0 0
    %958 = vmatpush.bf16.msra.mxu0 0
    %959 = vmatpush.bf16.msra.mxu0 %v950
    %960 = vmatmul.bf16.gmra.mxu0 %v947
    %v961 = vpop.f32.mrf.mxu0
    %v962 = vadd.f32 0.0, %v961
    %v963 = vpop.f32.mrf.mxu0
    %964 = vdwg.mxu0
    %v965 = vpack.c.bf16 %v962, %v962
    %966 = vrot.lane.b32.xlu0 %v907, 112
    %v967 = vpop.permute.xlu0 %966
    %968 = vrot.lane.b32.xlu0 %v907, 80
    %v969 = vpop.permute.xlu0 %968
    %v971 = vsel %vm208, %v967, 0
    %v974 = vsel %vm208, %v969, 0
    %976 = vmatpush.bf16.xpose.msra.mxu0 0
    %977 = vmatpush.bf16.xpose.msra.mxu0 0
    %978 = vmatpush.bf16.xpose.msra.mxu0 0
    %979 = vmatpush.bf16.xpose.msra.mxu0 0
    %980 = vmatpush.bf16.xpose.msra.mxu0 0
    %981 = vmatpush.bf16.xpose.msra.mxu0 0
    %982 = vmatpush.bf16.xpose.msra.mxu0 0
    %983 = vmatpush.bf16.xpose.msra.mxu0 %v974
    %984 = vmatmul.bf16.gmra.mxu0 %v971
    %v985 = vpop.f32.mrf.mxu0
    %v986 = vadd.f32 0.0, %v985
    %v987 = vpop.f32.mrf.mxu0
    %988 = vdwg.mxu0
    %v989 = vmul.f32 %v986, 0.25
    %v990 = vadd.f32 %v989, %v388
    %v991 = vsel %vm231, %v990, -inf
    %992 = vmax.xlane.f32.xlu0 %v991
    %v993 = vpop.xlane.xlu0 %992
    %v994 = vsub.f32 %v990, %v993
    %v995 = vmul.f32 %v994, 1.442695
    %v996 = vpow.pop %v995
    %v997 = vsel %vm231, %v996, 0.0
    %998 = vadd.xlane.f32.xlu0 %v997
    %v999 = vpop.xlane.xlu0 %998
    %v1000 = vrcp.pop %v999
    %v1001 = vmul.f32 %v996, %v1000
    %v1002 = vpack.c.bf16 %v1001, %v1001
    %1003 = vrot.lane.b32.xlu0 %v907, 48
    %v1004 = vpop.permute.xlu0 %1003
    %v1006 = vsel %vm231, %v1002, 0
    %v1009 = vsel %vm249, %v1004, 0
    %1011 = vmatpush.bf16.msra.mxu0 0
    %1012 = vmatpush.bf16.msra.mxu0 0
    %1013 = vmatpush.bf16.msra.mxu0 0
    %1014 = vmatpush.bf16.msra.mxu0 0
    %1015 = vmatpush.bf16.msra.mxu0 0
    %1016 = vmatpush.bf16.msra.mxu0 0
    %1017 = vmatpush.bf16.msra.mxu0 0
    %1018 = vmatpush.bf16.msra.mxu0 %v1009
    %1019 = vmatmul.bf16.gmra.mxu0 %v1006
    %v1020 = vpop.f32.mrf.mxu0
    %v1021 = vadd.f32 0.0, %v1020
    %v1022 = vpop.f32.mrf.mxu0
    %1023 = vdwg.mxu0
    %v1024 = vpack.c.bf16 %v1021, %v1021
    %v1026 = vsel %vm208, %v1024, 0
    %1028 = vmatpush.bf16.msra.mxu0 0
    %1029 = vmatpush.bf16.msra.mxu0 0
    %1030 = vmatpush.bf16.msra.mxu0 0
    %1031 = vmatpush.bf16.msra.mxu0 0
    %1032 = vmatpush.bf16.msra.mxu0 0
    %1033 = vmatpush.bf16.msra.mxu0 0
    %1034 = vmatpush.bf16.msra.mxu0 0
    %1035 = vmatpush.bf16.msra.mxu0 %v870
    %1036 = vmatmul.bf16.gmra.mxu0 %v1026
    %v1037 = vpop.f32.mrf.mxu0
    %v1038 = vadd.f32 0.0, %v1037
    %v1039 = vpop.f32.mrf.mxu0
    %1040 = vdwg.mxu0
    %v1042 = vsel %vm208, %v965, 0
    %1044 = vmatpush.bf16.msra.mxu0 0
    %1045 = vmatpush.bf16.msra.mxu0 0
    %1046 = vmatpush.bf16.msra.mxu0 0
    %1047 = vmatpush.bf16.msra.mxu0 0
    %1048 = vmatpush.bf16.msra.mxu0 0
    %1049 = vmatpush.bf16.msra.mxu0 0
    %1050 = vmatpush.bf16.msra.mxu0 0
    %1051 = vmatpush.bf16.msra.mxu0 %v889
    %1052 = vmatmul.bf16.gmra.mxu0 %v1042
    %v1053 = vpop.f32.mrf.mxu0
    %v1054 = vadd.f32 %v1038, %v1053
    %v1055 = vpop.f32.mrf.mxu0
    %1056 = vdwg.mxu0
    %v1057 = vperm.slane %v719, 1
    %v1058 = vadd.f32 %v904, %v1057
    %v1059 = vadd.f32 %v1054, %v1057
    %v1060 = vadd.f32 %v707, %v1058
    %v1061 = vadd.f32 %v708, %v1059
    %v1062 = vsel %vm105, %v1060, 0.0
    %1063 = vadd.xlane.f32.xlu0 %v1062
    %v1064 = vpop.xlane.xlu0 %1063
    %v1065 = vsel %vm105, %v1061, 0.0
    %1066 = vadd.xlane.f32.xlu0 %v1065
    %v1067 = vpop.xlane.xlu0 %1066
    %v1068 = vmul.f32 %v1064, %v118
    %v1069 = vmul.f32 %v1067, %v118
    %v1070 = vsub.f32 %v1060, %v1068
    %v1071 = vsub.f32 %v1061, %v1069
    %v1072 = vmul.f32 %v1070, %v1070
    %v1073 = vmul.f32 %v1071, %v1071
    %v1074 = vsel %vm105, %v1072, 0.0
    %1075 = vadd.xlane.f32.xlu0 %v1074
    %v1076 = vpop.xlane.xlu0 %1075
    %v1077 = vsel %vm105, %v1073, 0.0
    %1078 = vadd.xlane.f32.xlu0 %v1077
    %v1079 = vpop.xlane.xlu0 %1078
    %v1080 = vmul.f32 %v1076, %v118
    %v1081 = vmul.f32 %v1079, %v118
    %v1082 = vadd.f32 %v1080, 1e-12
    %v1083 = vadd.f32 %v1081, 1e-12
    %v1084 = vrsqrt.pop %v1082
    %v1085 = vmul.f32 %v1084, %v1082
    %v1086 = vmul.f32 %v1085, %v1084
    %v1087 = vmul.f32 0.5, %v1086
    %v1088 = vsub.f32 1.5, %v1087
    %v1089 = vmul.f32 %v1084, %v1088
    %vm1090 = vweird.f32 %v1082
    %vm1091 = vweird.f32 %v1084
    %vm1092 = vmor %vm1090, %vm1091
    %v1093 = vsel %vm1092, %v1084, %v1089
    %v1094 = vrsqrt.pop %v1083
    %v1095 = vmul.f32 %v1094, %v1083
    %v1096 = vmul.f32 %v1095, %v1094
    %v1097 = vmul.f32 0.5, %v1096
    %v1098 = vsub.f32 1.5, %v1097
    %v1099 = vmul.f32 %v1094, %v1098
    %vm1100 = vweird.f32 %v1083
    %vm1101 = vweird.f32 %v1094
    %vm1102 = vmor %vm1100, %vm1101
    %v1103 = vsel %vm1102, %v1094, %v1099
    %v1104 = vmul.f32 %v1070, %v1093
    %v1105 = vmul.f32 %v1071, %v1103
    %v1106 = vperm.slane %v719, 4
    %v1107 = vmul.f32 %v1104, %v1106
    %v1108 = vmul.f32 %v1105, %v1106
    %v1109 = vperm.slane %v719, 5
    %v1110 = vadd.f32 %v1107, %v1109
    %v1111 = vadd.f32 %v1108, %v1109
    %v1112 = vpack.c.bf16 %v1111, %v1110
    %v1113 = vperm.slane %v719, 2
    %v1114 = vunpack.c.h.b16 %v710
    %v1115 = vunpack.c.h.b16 %v711
    %v1116 = vunpack.c.h.b16 %v712
    %v1117 = vunpack.c.h.b16 %v713
    %v1118 = vpack.c.b16 %v1115, %v1114
    %v1119 = vpack.c.b16 %v1117, %v1116
    %v1123 = vsel %vm105, %v1112, 0
    %1125 = vmatpush.bf16.msra.mxu0 0
    %1126 = vmatpush.bf16.msra.mxu0 0
    %1127 = vmatpush.bf16.msra.mxu0 0
    %1128 = vmatpush.bf16.msra.mxu0 0
    %1129 = vmatpush.bf16.msra.mxu0 0
    %1130 = vmatpush.bf16.msra.mxu0 0
    %1131 = vmatpush.bf16.msra.mxu0 %v1119
    %1132 = vmatpush.bf16.msra.mxu0 %v1118
    %1133 = vmatmul.bf16.gmra.mxu0 %v1123
    %v1134 = vpop.f32.mrf.mxu0
    %v1135 = vadd.f32 %v1113, %v1134
    %v1136 = vpop.f32.mrf.mxu0
    %v1137 = vadd.f32 %v1113, %v1136
    %1138 = vdwg.mxu0
    %v1139 = vmul.f32 %v1135, %v1135
    %v1140 = vmul.f32 %v1137, %v1137
    %v1141 = vmul.f32 %v1135, %v1139
    %v1142 = vmul.f32 %v1137, %v1140
    %v1143 = vmul.f32 %v1141, 0.044715
    %v1144 = vmul.f32 %v1142, 0.044715
    %v1145 = vadd.f32 %v1135, %v1143
    %v1146 = vadd.f32 %v1137, %v1144
    %v1147 = vmul.f32 %v1145, 0.7978846
    %v1148 = vmul.f32 %v1146, 0.7978846
    %v1149 = vtanh.pop %v1147
    %v1150 = vtanh.pop %v1148
    %v1151 = vadd.f32 %v1149, 1.0
    %v1152 = vadd.f32 %v1150, 1.0
    %v1153 = vmul.f32 %v1151, 0.5
    %v1154 = vmul.f32 %v1152, 0.5
    %v1155 = vmul.f32 %v1135, %v1153
    %v1156 = vmul.f32 %v1137, %v1154
    %v1157 = vpack.c.bf16 %v1156, %v1155
    %v1158 = vperm.slane %v719, 3
    %v1163 = vunpack.c.h.b16 %v714
    %v1164 = vunpack.c.h.b16 %v715
    %v1165 = vunpack.c.h.b16 %v716
    %v1166 = vunpack.c.h.b16 %v717
    %v1167 = vpack.c.b16 %v1164, %v1163
    %v1168 = vpack.c.b16 %v1166, %v1165
    %1169 = vrot.lane.b32.xlu0 %v1118, 64
    %v1170 = vpop.permute.xlu0 %1169
    %1171 = vrot.lane.b32.xlu0 %v1119, 64
    %v1172 = vpop.permute.xlu0 %1171
    %1173 = vrot.lane.b32.xlu0 %v1167, 64
    %v1174 = vpop.permute.xlu0 %1173
    %1175 = vrot.lane.b32.xlu0 %v1168, 64
    %v1176 = vpop.permute.xlu0 %1175
    %v1182 = vsel %vm639, %v1157, 0
    %1184 = vmatpush.bf16.msra.mxu0 0
    %1185 = vmatpush.bf16.msra.mxu0 0
    %1186 = vmatpush.bf16.msra.mxu0 0
    %1187 = vmatpush.bf16.msra.mxu0 0
    %1188 = vmatpush.bf16.msra.mxu0 %v1176
    %1189 = vmatpush.bf16.msra.mxu0 %v1174
    %1190 = vmatpush.bf16.msra.mxu0 %v1172
    %1191 = vmatpush.bf16.msra.mxu0 %v1170
    %1192 = vmatmul.bf16.gmra.mxu0 %v1182
    %v1193 = vpop.f32.mrf.mxu0
    %v1194 = vadd.f32 %v1158, %v1193
    %v1195 = vpop.f32.mrf.mxu0
    %v1196 = vadd.f32 %v1158, %v1195
    %1197 = vdwg.mxu0
    %v1198 = vadd.f32 %v1110, %v1194
    %v1199 = vadd.f32 %v1111, %v1196
    %v1200 = vsel %vm105, %v1198, 0.0
    %1201 = vadd.xlane.f32.xlu0 %v1200
    %v1202 = vpop.xlane.xlu0 %1201
    %v1203 = vsel %vm105, %v1199, 0.0
    %1204 = vadd.xlane.f32.xlu0 %v1203
    %v1205 = vpop.xlane.xlu0 %1204
    %v1206 = vmul.f32 %v1202, %v118
    %v1207 = vmul.f32 %v1205, %v118
    %v1208 = vsub.f32 %v1198, %v1206
    %v1209 = vsub.f32 %v1199, %v1207
    %v1210 = vmul.f32 %v1208, %v1208
    %v1211 = vmul.f32 %v1209, %v1209
    %v1212 = vsel %vm105, %v1210, 0.0
    %1213 = vadd.xlane.f32.xlu0 %v1212
    %v1214 = vpop.xlane.xlu0 %1213
    %v1215 = vsel %vm105, %v1211, 0.0
    %1216 = vadd.xlane.f32.xlu0 %v1215
    %v1217 = vpop.xlane.xlu0 %1216
    %v1218 = vmul.f32 %v1214, %v118
    %v1219 = vmul.f32 %v1217, %v118
    %v1220 = vadd.f32 %v1218, 1e-12
    %v1221 = vadd.f32 %v1219, 1e-12
    %v1222 = vrsqrt.pop %v1220
    %v1223 = vmul.f32 %v1222, %v1220
    %v1224 = vmul.f32 %v1223, %v1222
    %v1225 = vmul.f32 0.5, %v1224
    %v1226 = vsub.f32 1.5, %v1225
    %v1227 = vmul.f32 %v1222, %v1226
    %vm1228 = vweird.f32 %v1220
    %vm1229 = vweird.f32 %v1222
    %vm1230 = vmor %vm1228, %vm1229
    %v1231 = vsel %vm1230, %v1222, %v1227
    %v1232 = vrsqrt.pop %v1221
    %v1233 = vmul.f32 %v1232, %v1221
    %v1234 = vmul.f32 %v1233, %v1232
    %v1235 = vmul.f32 0.5, %v1234
    %v1236 = vsub.f32 1.5, %v1235
    %v1237 = vmul.f32 %v1232, %v1236
    %vm1238 = vweird.f32 %v1221
    %vm1239 = vweird.f32 %v1232
    %vm1240 = vmor %vm1238, %vm1239
    %v1241 = vsel %vm1240, %v1232, %v1237
    %v1242 = vmul.f32 %v1208, %v1231
    %v1243 = vmul.f32 %v1209, %v1241
    %v1244 = vperm.slane %v719, 6
    %v1245 = vmul.f32 %v1242, %v1244
    %v1246 = vmul.f32 %v1243, %v1244
    %v1247 = vperm.slane %v719, 7
    %v1248 = vadd.f32 %v1245, %v1247
    %v1249 = vadd.f32 %v1246, %v1247
    %v1251 = vrot.slane %v1249, 7
    %vm1253 = vcmask 1040384
    %v1254 = vsel %vm1253, %v1248, %v1251
    %v1255 = vld [vmem:[#allocation10] sm:$0xf]
    %v1256 = vld [vmem:[#allocation10 + $0x8] sm:$0xf]
    %v1257 = vld [vmem:[#allocation10 + $0x10] sm:$0xf]
    %v1258 = vld [vmem:[#allocation10 + $0x18] sm:$0xf]
    %v1259 = vld [vmem:[#allocation10] sm:$0xff]
    %v1260 = vld [vmem:[#allocation10 + $0x8] sm:$0xff]
    %v1261 = vld [vmem:[#allocation10 + $0x10] sm:$0xff]
    %v1262 = vld [vmem:[#allocation10 + $0x18] sm:$0xff]
    %v1263 = vld [vmem:[%s5 + $0x2] sm:$0x1]
    %v1264 = vld [vmem:[%s5 + $0x3] sm:$0x1]
    %v1265 = vpack.c.bf16 %v1254, %v1254
    %v1266 = vperm.slane %v1263, 0
    %v1271 = vunpack.c.l.b16 %v1255
    %v1272 = vunpack.c.l.b16 %v1256
    %v1273 = vunpack.c.l.b16 %v1257
    %v1274 = vunpack.c.l.b16 %v1258
    %v1275 = vpack.c.b16 %v1272, %v1271
    %v1276 = vpack.c.b16 %v1274, %v1273
    %v1280 = vsel %vm105, %v1265, 0
    %1282 = vmatpush.bf16.msra.mxu0 0
    %1283 = vmatpush.bf16.msra.mxu0 0
    %1284 = vmatpush.bf16.msra.mxu0 0
    %1285 = vmatpush.bf16.msra.mxu0 0
    %1286 = vmatpush.bf16.msra.mxu0 0
    %1287 = vmatpush.bf16.msra.mxu0 0
    %1288 = vmatpush.bf16.msra.mxu0 %v1276
    %1289 = vmatpush.bf16.msra.mxu0 %v1275
    %1290 = vmatmul.bf16.gmra.mxu0 %v1280
    %v1291 = vpop.f32.mrf.mxu0
    %v1292 = vadd.f32 %v1266, %v1291
    %v1293 = vpop.f32.mrf.mxu0
    %1294 = vdwg.mxu0
    %v1295 = vtanh.pop %v1292
    %v1296 = vpack.c.bf16 %v1295, %v1295
    %v1297 = vperm.slane %v1264, 0
    %v1302 = vunpack.c.l.b16 %v1259
    %v1303 = vunpack.c.h.b16 %v1259
    %v1304 = vunpack.c.l.b16 %v1260
    %v1305 = vunpack.c.h.b16 %v1260
    %v1306 = vunpack.c.l.b16 %v1261
    %v1307 = vunpack.c.h.b16 %v1261
    %v1308 = vunpack.c.l.b16 %v1262
    %v1309 = vunpack.c.h.b16 %v1262
    %v1310 = vpack.c.b16 %v1304, %v1302
    %v1311 = vpack.c.b16 %v1305, %v1303
    %v1312 = vpack.c.b16 %v1308, %v1306
    %v1313 = vpack.c.b16 %v1309, %v1307
    %1314 = vrot.lane.b32.xlu0 %v1310, 96
    %v1315 = vpop.permute.xlu0 %1314
    %1316 = vrot.lane.b32.xlu0 %v1311, 96
    %v1317 = vpop.permute.xlu0 %1316
    %1318 = vrot.lane.b32.xlu0 %v1312, 96
    %v1319 = vpop.permute.xlu0 %1318
    %1320 = vrot.lane.b32.xlu0 %v1313, 96
    %v1321 = vpop.permute.xlu0 %1320
    %vm1322 = vcmask 785408
    %v1323 = vsel %vm1322, %v1315, %v1317
    %v1324 = vsel %vm1322, %v1319, %v1321
    %v1328 = vsel %vm105, %v1296, 0
    %1330 = vmatpush.bf16.msra.mxu0 0
    %1331 = vmatpush.bf16.msra.mxu0 0
    %1332 = vmatpush.bf16.msra.mxu0 0
    %1333 = vmatpush.bf16.msra.mxu0 0
    %1334 = vmatpush.bf16.msra.mxu0 0
    %1335 = vmatpush.bf16.msra.mxu0 0
    %1336 = vmatpush.bf16.msra.mxu0 %v1324
    %1337 = vmatpush.bf16.msra.mxu0 %v1323
    %1338 = vmatmul.bf16.gmra.mxu0 %v1328
    %v1339 = vpop.f32.mrf.mxu0
    %v1340 = vadd.f32 %v1297, %v1339
    %v1341 = vpop.f32.mrf.mxu0
    %1342 = vdwg.mxu0
    %1343 = vst [vmem:[#allocation11] sm:$0x3] %v1340
    // Predicated region
    $region46: #{tpu_custom_call.1} parent=1 // pred_check
      _
    $region47: #{tpu_custom_call.1} parent=1 // pred_check_branch
      %1345 = sbr.rel (0) target = $region49
    $region48: #{tpu_custom_call.1} parent=1 // pred_region
      %1347 = vsyncadd [#allocation4], 0
      %s1349 = sshll.u32 [#allocation11], 4
      %s1350 = int_to_ptr.vmem [resolvable:$true] %s1349
      %s1351 = sshll.u32 %s6, 4
      %s1352 = int_to_ptr.hbm [resolvable:$true] %s1351
      %1354 = dma.vmem_to_hbm [thread:$0]  %s1350, 32, %s1352, [#allocation4]
    $region49: #{tpu_custom_call.1} parent=1 // pred_fallthru
      _
    // Predicated region
    $region50: #{tpu_custom_call.1} parent=1 // pred_check
      _
    $region51: #{tpu_custom_call.1} parent=1 // pred_check_branch
      %1356 = sbr.rel (0) target = $region53
    $region52: #{tpu_custom_call.1} parent=1 // pred_region
      %1358 = dma.done [#allocation4], 32
    $region53: #{tpu_custom_call.1} parent=1 // pred_fallthru
      _
    %1359 = vsyncpa [#allocation3], 1
    %1360 = vsyncpa [#allocation6], 1
    %1361 = vsyncpa [#allocation9], 1
    %1362 = vsyncpa [#allocation4], 1

</llo_original>
